<compile_context>
chip_gen: v6e
topology: v6e:2x2x1
jax: 0.10.0
libtpu: 0.0.40
codegen_flags: <defaults>
</compile_context>

<pallas_src>
import jax
import jax.numpy as jnp
from jax.experimental import pallas as pl
from jax.experimental.pallas import tpu as pltpu


def af4_kernel(t_ref, w1_ref, b1_ref, w2_ref, b2_ref, scale_ref, o_ref):
    C = t_ref.shape[1]
    inter = w2_ref.shape[1]

    t = t_ref[...]                                   # (bm, C, D) — loaded once
    s = jnp.sum(t, axis=1)                           # (bm, D) == t.transpose(1,2).sum(-1)

    # Stage 1 for all C branches in a single wide matmul: (bm, D) @ (D, C*inter).
    # BN affine + conv bias are pre-folded into w1/b1 in the wrapper.
    h = jnp.dot(s, w1_ref[...], preferred_element_type=jnp.float32) + b1_ref[...]
    h = jnp.maximum(h, 0.0)                          # (bm, C*inter)

    # Stage 2 per branch (C is tiny -> static unroll), fused with the final
    # weighted sum over modalities.
    acc = None
    for j in range(C):
        hj = h[:, j * inter:(j + 1) * inter]         # (bm, inter) static slice
        yj = jnp.dot(hj, w2_ref[j], preferred_element_type=jnp.float32) + b2_ref[j]
        wj = jax.nn.sigmoid(yj)                      # (bm, D)
        contrib = wj * t[:, j, :]
        acc = contrib if acc is None else acc + contrib

    o_ref[...] = acc * (3.0 * scale_ref[0])


def _pick_bm(B):
    # B-tile for a "parallel" grid axis (helps v7x megacore when B is large);
    # fall back to the whole batch when it doesn't tile evenly.
    for cand in (256, 128):
        if B % cand == 0:
            return cand
    return B


def af4_forward(t, params):
    B, C, D = t.shape
    inter = params["w1"].shape[-1]
    eps = 1e-5

    # Fold BatchNorm (eval mode) into the conv weights/biases:
    #   (x @ W + b) * a + c  ==  x @ (W * a) + (b * a + c)
    a1 = params["gamma1"] / jnp.sqrt(params["var1"] + eps)          # (C, inter)
    c1 = params["beta1"] - params["mean1"] * a1
    a2 = params["gamma2"] / jnp.sqrt(params["var2"] + eps)          # (C, D)
    c2 = params["beta2"] - params["mean2"] * a2

    w1_f = params["w1"] * a1[:, None, :]                            # (C, D, inter)
    b1_f = params["b1"] * a1 + c1                                   # (C, inter)
    w2_f = params["w2"] * a2[:, None, :]                            # (C, inter, D)
    b2_f = params["b2"] * a2 + c2                                   # (C, D)

    # Merge the C first-stage weights into one (D, C*inter) matrix so the first
    # matmul covers all branches at once (column block j -> branch j).
    w1_cat = jnp.transpose(w1_f, (1, 0, 2)).reshape(D, C * inter)   # (D, C*inter)
    b1_cat = b1_f.reshape(1, C * inter)                             # (1, C*inter)
    b2_3d = b2_f[:, None, :]                                        # (C, 1, D)

    bm = _pick_bm(B)
    grid = (B // bm,)

    out = pl.pallas_call(
        af4_kernel,
        out_shape=jax.ShapeDtypeStruct((B, D), jnp.float32),
        grid=grid,
        in_specs=[
            pl.BlockSpec((bm, C, D), lambda i: (i, 0, 0)),          # t block (B-tiled)
            pl.BlockSpec((D, C * inter), lambda i: (0, 0)),         # fused W1
            pl.BlockSpec((1, C * inter), lambda i: (0, 0)),         # fused b1
            pl.BlockSpec((C, inter, D), lambda i: (0, 0, 0)),       # fused W2
            pl.BlockSpec((C, 1, D), lambda i: (0, 0, 0)),           # fused b2
            pl.BlockSpec(memory_space=pltpu.SMEM),                  # scale (scalar)
        ],
        out_specs=pl.BlockSpec((bm, D), lambda i: (i, 0)),
        compiler_params=pltpu.CompilerParams(
            dimension_semantics=("parallel",)),
    )(t, w1_cat, b1_cat, w2_f, b2_3d, params["scale"])
    return out


def af4_reference(t, params):
    """Plain-JAX reference mirroring the PyTorch forward (BN in eval mode, unfused)."""
    eps = 1e-5
    tt = jnp.swapaxes(t, 1, 2)           # (B, D, C)
    s = tt.sum(-1)                       # (B, D)
    out = jnp.zeros((t.shape[0], t.shape[2]), jnp.float32)
    for j in range(t.shape[1]):
        h = s @ params["w1"][j] + params["b1"][j]
        h = (h - params["mean1"][j]) / jnp.sqrt(params["var1"][j] + eps) \
            * params["gamma1"][j] + params["beta1"][j]
        h = jnp.maximum(h, 0.0)
        y = h @ params["w2"][j] + params["b2"][j]
        y = (y - params["mean2"][j]) / jnp.sqrt(params["var2"][j] + eps) \
            * params["gamma2"][j] + params["beta2"][j]
        w = jax.nn.sigmoid(y)
        out = out + w * tt[:, :, j]
    return out * 3.0 * params["scale"][0]


def init_params(key, C, D, r):
    inter = D // r
    ks = jax.random.split(key, 13)
    u = lambda k, shape, scl: (jax.random.uniform(k, shape, jnp.float32, -1.0, 1.0) * scl)
    params = {
        # Conv1d(k=1) weights stored pre-transposed: y = x @ W + b
        "w1": u(ks[0], (C, D, inter), 1.0 / jnp.sqrt(D)),
        "b1": u(ks[1], (C, inter), 1.0 / jnp.sqrt(D)),
        "w2": u(ks[2], (C, inter, D), 1.0 / jnp.sqrt(inter)),
        "b2": u(ks[3], (C, D), 1.0 / jnp.sqrt(inter)),
        # BatchNorm1d(inter) running stats + affine
        "gamma1": 1.0 + 0.1 * jax.random.normal(ks[4], (C, inter), jnp.float32),
        "beta1": 0.1 * jax.random.normal(ks[5], (C, inter), jnp.float32),
        "mean1": 0.1 * jax.random.normal(ks[6], (C, inter), jnp.float32),
        "var1": jax.random.uniform(ks[7], (C, inter), jnp.float32, 0.5, 1.5),
        # BatchNorm1d(dim) running stats + affine
        "gamma2": 1.0 + 0.1 * jax.random.normal(ks[8], (C, D), jnp.float32),
        "beta2": 0.1 * jax.random.normal(ks[9], (C, D), jnp.float32),
        "mean2": 0.1 * jax.random.normal(ks[10], (C, D), jnp.float32),
        "var2": jax.random.uniform(ks[11], (C, D), jnp.float32, 0.5, 1.5),
        # AF_4.scale parameter (init 1.0)
        "scale": jnp.array([1.0], jnp.float32),
    }
    return params


if __name__ == "__main__":
    B, C, D, r = 2, 3, 512, 4      # channel=3 modalities, dim=512 (module default)
    key = jax.random.PRNGKey(0)
    k_t, k_p = jax.random.split(key)
    t = jax.random.normal(k_t, (B, C, D), jnp.float32)
    params = init_params(k_p, C, D, r)

    out = af4_forward(t, params)
    out = jax.block_until_ready(out)

    ref = af4_reference(t, params)
    assert out.shape == (B, D)
    assert jnp.allclose(out, ref, atol=1e-4, rtol=1e-4), "mismatch vs JAX reference"

    print("KERNEL_OK")
</pallas_src>

<mosaic_0001>
module attributes {stable_mosaic.version = 11 : i64} {
  func.func @af4_kernel(%arg0: i32, %arg1: memref<2x3x512xf32, #tpu.memory_space<vmem>>, %arg2: memref<512x384xf32, #tpu.memory_space<vmem>>, %arg3: memref<1x384xf32, #tpu.memory_space<vmem>>, %arg4: memref<3x128x512xf32, #tpu.memory_space<vmem>>, %arg5: memref<3x1x512xf32, #tpu.memory_space<vmem>>, %arg6: memref<1xf32, #tpu.memory_space<smem>>, %arg7: memref<2x512xf32, #tpu.memory_space<vmem>>) attributes {dimension_semantics = [#tpu.dimension_semantics<parallel>], iteration_bounds = array<i64: 1>, scalar_prefetch = 0 : i64, scratch_operands = 0 : i64, tpu.core_type = #tpu.core_type<tc>, window_params = [{transform_indices = @transform_0, window_bounds = array<i64: 2, 3, 512>}, {pipeline_mode = #tpu.pipeline_mode<synchronous>, transform_indices = @transform_1, window_bounds = array<i64: 512, 384>}, {pipeline_mode = #tpu.pipeline_mode<synchronous>, transform_indices = @transform_2, window_bounds = array<i64: 1, 384>}, {pipeline_mode = #tpu.pipeline_mode<synchronous>, transform_indices = @transform_3, window_bounds = array<i64: 3, 128, 512>}, {pipeline_mode = #tpu.pipeline_mode<synchronous>, transform_indices = @transform_4, window_bounds = array<i64: 3, 1, 512>}, {transform_indices = @transform_5, window_bounds = array<i64: 1>}, {transform_indices = @transform_6, window_bounds = array<i64: 2, 512>}]} {
    %c0 = arith.constant 0 : index
    %c0_0 = arith.constant 0 : index
    %c0_1 = arith.constant 0 : index
    %0 = vector.load %arg1[%c0, %c0_0, %c0_1] : memref<2x3x512xf32, #tpu.memory_space<vmem>>, vector<2x3x512xf32>
    %cst = arith.constant dense<0.000000e+00> : vector<2x512xf32>
    %1 = vector.multi_reduction <add>, %0, %cst [1] : vector<2x3x512xf32> to vector<2x512xf32>
    %c0_2 = arith.constant 0 : index
    %c0_3 = arith.constant 0 : index
    %2 = vector.load %arg2[%c0_2, %c0_3] : memref<512x384xf32, #tpu.memory_space<vmem>>, vector<512x384xf32>
    %cst_4 = arith.constant dense<0.000000e+00> : vector<2x384xf32>
    %3 = tpu.matmul %1, %2, %cst_4 {dimension_numbers = #tpu.dot_dimension_numbers<[1], [0], [0], [1], [0, 0, 1, 1], [], []>} : vector<2x512xf32>, vector<512x384xf32>, vector<2x384xf32> -> vector<2x384xf32>
    %c0_5 = arith.constant 0 : index
    %c0_6 = arith.constant 0 : index
    %4 = vector.load %arg3[%c0_5, %c0_6] : memref<1x384xf32, #tpu.memory_space<vmem>>, vector<1x384xf32>
    %5 = vector.broadcast %4 : vector<1x384xf32> to vector<2x384xf32>
    %6 = arith.addf %3, %5 : vector<2x384xf32>
    %cst_7 = arith.constant 0.000000e+00 : f32
    %7 = vector.broadcast %cst_7 : f32 to vector<2x384xf32>
    %8 = arith.maximumf %6, %7 : vector<2x384xf32>
    %9 = vector.extract_strided_slice %8 {offsets = [0, 0], sizes = [2, 128], strides = [1, 1]} : vector<2x384xf32> to vector<2x128xf32>
    %c0_8 = arith.constant 0 : index
    %c0_9 = arith.constant 0 : index
    %c0_10 = arith.constant 0 : index
    %10 = vector.load %arg4[%c0_8, %c0_9, %c0_10] : memref<3x128x512xf32, #tpu.memory_space<vmem>>, vector<1x128x512xf32>
    %11 = vector.shape_cast %10 : vector<1x128x512xf32> to vector<128x512xf32>
    %cst_11 = arith.constant dense<0.000000e+00> : vector<2x512xf32>
    %12 = tpu.matmul %9, %11, %cst_11 {dimension_numbers = #tpu.dot_dimension_numbers<[1], [0], [0], [1], [0, 0, 1, 1], [], []>} : vector<2x128xf32>, vector<128x512xf32>, vector<2x512xf32> -> vector<2x512xf32>
    %c0_12 = arith.constant 0 : index
    %c0_13 = arith.constant 0 : index
    %c0_14 = arith.constant 0 : index
    %13 = vector.load %arg5[%c0_12, %c0_13, %c0_14] : memref<3x1x512xf32, #tpu.memory_space<vmem>>, vector<1x1x512xf32>
    %14 = vector.shape_cast %13 : vector<1x1x512xf32> to vector<1x512xf32>
    %15 = vector.broadcast %14 : vector<1x512xf32> to vector<2x512xf32>
    %16 = arith.addf %12, %15 : vector<2x512xf32>
    %17 = arith.negf %16 : vector<2x512xf32>
    %18 = math.exp %17 : vector<2x512xf32>
    %cst_15 = arith.constant 1.000000e+00 : f32
    %19 = vector.broadcast %cst_15 : f32 to vector<2x512xf32>
    %20 = arith.addf %19, %18 : vector<2x512xf32>
    %21 = arith.divf %19, %20 : vector<2x512xf32>
    %22 = vector.extract_strided_slice %0 {offsets = [0, 0, 0], sizes = [2, 1, 512], strides = [1, 1, 1]} : vector<2x3x512xf32> to vector<2x1x512xf32>
    %23 = vector.shape_cast %22 : vector<2x1x512xf32> to vector<2x512xf32>
    %24 = arith.mulf %21, %23 : vector<2x512xf32>
    %25 = vector.extract_strided_slice %8 {offsets = [0, 128], sizes = [2, 128], strides = [1, 1]} : vector<2x384xf32> to vector<2x128xf32>
    %c1 = arith.constant 1 : index
    %c0_16 = arith.constant 0 : index
    %c0_17 = arith.constant 0 : index
    %26 = vector.load %arg4[%c1, %c0_16, %c0_17] : memref<3x128x512xf32, #tpu.memory_space<vmem>>, vector<1x128x512xf32>
    %27 = vector.shape_cast %26 : vector<1x128x512xf32> to vector<128x512xf32>
    %cst_18 = arith.constant dense<0.000000e+00> : vector<2x512xf32>
    %28 = tpu.matmul %25, %27, %cst_18 {dimension_numbers = #tpu.dot_dimension_numbers<[1], [0], [0], [1], [0, 0, 1, 1], [], []>} : vector<2x128xf32>, vector<128x512xf32>, vector<2x512xf32> -> vector<2x512xf32>
    %c1_19 = arith.constant 1 : index
    %c0_20 = arith.constant 0 : index
    %c0_21 = arith.constant 0 : index
    %29 = vector.load %arg5[%c1_19, %c0_20, %c0_21] : memref<3x1x512xf32, #tpu.memory_space<vmem>>, vector<1x1x512xf32>
    %30 = vector.shape_cast %29 : vector<1x1x512xf32> to vector<1x512xf32>
    %31 = vector.broadcast %30 : vector<1x512xf32> to vector<2x512xf32>
    %32 = arith.addf %28, %31 : vector<2x512xf32>
    %33 = arith.negf %32 : vector<2x512xf32>
    %34 = math.exp %33 : vector<2x512xf32>
    %cst_22 = arith.constant 1.000000e+00 : f32
    %35 = vector.broadcast %cst_22 : f32 to vector<2x512xf32>
    %36 = arith.addf %35, %34 : vector<2x512xf32>
    %37 = arith.divf %35, %36 : vector<2x512xf32>
    %38 = vector.extract_strided_slice %0 {offsets = [0, 1, 0], sizes = [2, 1, 512], strides = [1, 1, 1]} : vector<2x3x512xf32> to vector<2x1x512xf32>
    %39 = vector.shape_cast %38 : vector<2x1x512xf32> to vector<2x512xf32>
    %40 = arith.mulf %37, %39 : vector<2x512xf32>
    %41 = arith.addf %24, %40 : vector<2x512xf32>
    %42 = vector.extract_strided_slice %8 {offsets = [0, 256], sizes = [2, 128], strides = [1, 1]} : vector<2x384xf32> to vector<2x128xf32>
    %c2 = arith.constant 2 : index
    %c0_23 = arith.constant 0 : index
    %c0_24 = arith.constant 0 : index
    %43 = vector.load %arg4[%c2, %c0_23, %c0_24] : memref<3x128x512xf32, #tpu.memory_space<vmem>>, vector<1x128x512xf32>
    %44 = vector.shape_cast %43 : vector<1x128x512xf32> to vector<128x512xf32>
    %cst_25 = arith.constant dense<0.000000e+00> : vector<2x512xf32>
    %45 = tpu.matmul %42, %44, %cst_25 {dimension_numbers = #tpu.dot_dimension_numbers<[1], [0], [0], [1], [0, 0, 1, 1], [], []>} : vector<2x128xf32>, vector<128x512xf32>, vector<2x512xf32> -> vector<2x512xf32>
    %c2_26 = arith.constant 2 : index
    %c0_27 = arith.constant 0 : index
    %c0_28 = arith.constant 0 : index
    %46 = vector.load %arg5[%c2_26, %c0_27, %c0_28] : memref<3x1x512xf32, #tpu.memory_space<vmem>>, vector<1x1x512xf32>
    %47 = vector.shape_cast %46 : vector<1x1x512xf32> to vector<1x512xf32>
    %48 = vector.broadcast %47 : vector<1x512xf32> to vector<2x512xf32>
    %49 = arith.addf %45, %48 : vector<2x512xf32>
    %50 = arith.negf %49 : vector<2x512xf32>
    %51 = math.exp %50 : vector<2x512xf32>
    %cst_29 = arith.constant 1.000000e+00 : f32
    %52 = vector.broadcast %cst_29 : f32 to vector<2x512xf32>
    %53 = arith.addf %52, %51 : vector<2x512xf32>
    %54 = arith.divf %52, %53 : vector<2x512xf32>
    %55 = vector.extract_strided_slice %0 {offsets = [0, 2, 0], sizes = [2, 1, 512], strides = [1, 1, 1]} : vector<2x3x512xf32> to vector<2x1x512xf32>
    %56 = vector.shape_cast %55 : vector<2x1x512xf32> to vector<2x512xf32>
    %57 = arith.mulf %54, %56 : vector<2x512xf32>
    %58 = arith.addf %41, %57 : vector<2x512xf32>
    %c0_30 = arith.constant 0 : index
    %59 = memref.load %arg6[%c0_30] : memref<1xf32, #tpu.memory_space<smem>>
    %cst_31 = arith.constant 3.000000e+00 : f32
    %60 = arith.mulf %cst_31, %59 : f32
    %61 = vector.broadcast %60 : f32 to vector<2x512xf32>
    %62 = arith.mulf %58, %61 : vector<2x512xf32>
    %c0_32 = arith.constant 0 : index
    %c0_33 = arith.constant 0 : index
    %63 = vector.load %arg7[%c0_32, %c0_33] : memref<2x512xf32, #tpu.memory_space<vmem>>, vector<2x512xf32>
    tpu.vector_store %arg7[%c0_32, %c0_33], %62 {strides = array<i32>} : memref<2x512xf32, #tpu.memory_space<vmem>>, vector<2x512xf32>,
    return
  }
  func.func @transform_0(%arg0: i32) -> (i32, i32, i32) {
    %c0_i32 = arith.constant 0 : i32
    %c0_i32_0 = arith.constant 0 : i32
    %c0_i32_1 = arith.constant 0 : i32
    return %arg0, %c0_i32, %c0_i32_0 : i32, i32, i32
  }
  func.func @transform_1(%arg0: i32) -> (i32, i32) {
    %c0_i32 = arith.constant 0 : i32
    %c0_i32_0 = arith.constant 0 : i32
    %c0_i32_1 = arith.constant 0 : i32
    return %c0_i32, %c0_i32_0 : i32, i32
  }
  func.func @transform_2(%arg0: i32) -> (i32, i32) {
    %c0_i32 = arith.constant 0 : i32
    %c0_i32_0 = arith.constant 0 : i32
    %c0_i32_1 = arith.constant 0 : i32
    return %c0_i32, %c0_i32_0 : i32, i32
  }
  func.func @transform_3(%arg0: i32) -> (i32, i32, i32) {
    %c0_i32 = arith.constant 0 : i32
    %c0_i32_0 = arith.constant 0 : i32
    %c0_i32_1 = arith.constant 0 : i32
    %c0_i32_2 = arith.constant 0 : i32
    return %c0_i32, %c0_i32_0, %c0_i32_1 : i32, i32, i32
  }
  func.func @transform_4(%arg0: i32) -> (i32, i32, i32) {
    %c0_i32 = arith.constant 0 : i32
    %c0_i32_0 = arith.constant 0 : i32
    %c0_i32_1 = arith.constant 0 : i32
    %c0_i32_2 = arith.constant 0 : i32
    return %c0_i32, %c0_i32_0, %c0_i32_1 : i32, i32, i32
  }
  func.func @transform_5(%arg0: i32) -> i32 {
    %c0_i32 = arith.constant 0 : i32
    %c0_i32_0 = arith.constant 0 : i32
    return %c0_i32 : i32
  }
  func.func @transform_6(%arg0: i32) -> (i32, i32) {
    %c0_i32 = arith.constant 0 : i32
    %c0_i32_0 = arith.constant 0 : i32
    return %arg0, %c0_i32 : i32, i32
  }
}

</mosaic_0001>

<llo_original>
// kernel: tpu_custom_call.1
$region0: #{tpu_custom_call.1}
  #allocation0 [shape = 'u32[]', space=smem, size = 0x4, offset = 0x4, fixed_abs, tag = 'smem constant byte address 0x4 - core index']
  #allocation1 [shape = 'u32[144,128]{1,0:T(1,128)}', space=vmem, size = 0x12000, scoped, tag = 'internal scratch']
  #allocation2 [shape = 'f32[1]{0:T(128)S(6)}', space=smem, size = 0x200, scoped, tag = 'scoped memory for tpu_custom_call.1']
  %s0 = inlined_call_operand.vmem [shape: f32[2,3,512], index: 0, kind: input, shape index: {}]
  %s1 = inlined_call_operand.hbm [shape: f32[512,384], index: 1, kind: input, shape index: {}]
  %s2 = inlined_call_operand.vmem [shape: f32[1,384], index: 2, kind: input, shape index: {}]
  %s3 = inlined_call_operand.hbm [shape: f32[3,128,512], index: 3, kind: input, shape index: {}]
  %s4 = inlined_call_operand.vmem [shape: f32[3,1,512], index: 4, kind: input, shape index: {}]
  %s5 = inlined_call_operand.<no memory space> [shape: f32[1], index: 5, kind: input, shape index: {}]
  %s6 = inlined_call_operand.hbm [shape: f32[2,512], index: 6, kind: output, shape index: {}]
  %s7 = sld [smem:[#allocation0]]
  $region42: #{tpu_custom_call.1} parent=0
    _
  %s9 = ssub.s32 1, %s7
  %s10 = scalar_select 0, %s9, %s7
  %11 = sst [smem:[#allocation2]] %s5
  $region1: #{tpu_custom_call.1} parent=0
    #allocation3 [shape = 'u8[786432]{0}', space=vmem, size = 0xc0000, scoped, tag = 'input window, operand 1, single buffered']
    #allocation4 [shape = 's32[1]{0}', space=sflag, size = 0x4, scoped, tag = 'scoped memory for tpu_custom_call.1']
    #allocation5 [shape = 's32[1]{0}', space=sflag, size = 0x4, scoped, tag = 'scoped memory for tpu_custom_call.1']
    #allocation6 [shape = 'u8[786432]{0}', space=vmem, size = 0xc0000, scoped, tag = 'input window, operand 3, single buffered']
    #allocation7 [shape = 's32[1]{0}', space=sflag, size = 0x4, scoped, tag = 'scoped memory for tpu_custom_call.1']
    #allocation8 [shape = 'u8[4096]{0}', space=vmem, size = 0x1000, scoped, tag = 'output window, operand 0, single buffered']
    %12 = vsyncpa [#allocation4], 0
    %13 = vsyncpa [#allocation7], 0
    %14 = vsyncpa [#allocation5], 0
    // Predicated region
    $region2: #{tpu_custom_call.1} parent=1 // pred_check
      _
    $region3: #{tpu_custom_call.1} parent=1 // pred_check_branch
      %16 = sbr.rel (0) target = $region5
    $region4: #{tpu_custom_call.1} parent=1 // pred_region
      _
    $region5: #{tpu_custom_call.1} parent=1 // pred_fallthru
      _
    // Predicated region
    $region6: #{tpu_custom_call.1} parent=1 // pred_check
      _
    $region7: #{tpu_custom_call.1} parent=1 // pred_check_branch
      %18 = sbr.rel (0) target = $region9
    $region8: #{tpu_custom_call.1} parent=1 // pred_region
      %s20 = ssub.s32 24576, 24576
      %21 = vsyncadd [#allocation4], %s20
      %s22 = sshll.u32 [#allocation3], 4
      %s23 = int_to_ptr.vmem [resolvable:$true] %s22
      %28 = dma.hbm_to_vmem [thread:$0]  %s1, 24576, %s23, [#allocation4], 384, 384, 24
    $region9: #{tpu_custom_call.1} parent=1 // pred_fallthru
      _
    // Predicated region
    $region10: #{tpu_custom_call.1} parent=1 // pred_check
      _
    $region11: #{tpu_custom_call.1} parent=1 // pred_check_branch
      %30 = sbr.rel (0) target = $region13
    $region12: #{tpu_custom_call.1} parent=1 // pred_region
      _
    $region13: #{tpu_custom_call.1} parent=1 // pred_fallthru
      _
    // Predicated region
    $region14: #{tpu_custom_call.1} parent=1 // pred_check
      _
    $region15: #{tpu_custom_call.1} parent=1 // pred_check_branch
      %32 = sbr.rel (0) target = $region17
    $region16: #{tpu_custom_call.1} parent=1 // pred_region
      %s34 = ssub.s32 24576, 24576
      %35 = vsyncadd [#allocation7], %s34
      %s36 = sshll.u32 [#allocation6], 4
      %s37 = int_to_ptr.vmem [resolvable:$true] %s36
      %42 = dma.hbm_to_vmem [thread:$0]  %s3, 24576, %s37, [#allocation7], 512, 512, 32
    $region17: #{tpu_custom_call.1} parent=1 // pred_fallthru
      _
    // Predicated region
    $region18: #{tpu_custom_call.1} parent=1 // pred_check
      _
    $region19: #{tpu_custom_call.1} parent=1 // pred_check_branch
      %44 = sbr.rel (0) target = $region21
    $region20: #{tpu_custom_call.1} parent=1 // pred_region
      _
    $region21: #{tpu_custom_call.1} parent=1 // pred_fallthru
      _
    // Predicated region
    $region22: #{tpu_custom_call.1} parent=1 // pred_check
      _
    $region23: #{tpu_custom_call.1} parent=1 // pred_check_branch
      %46 = sbr.rel (0) target = $region25
    $region24: #{tpu_custom_call.1} parent=1 // pred_region
      _
    $region25: #{tpu_custom_call.1} parent=1 // pred_fallthru
      _
    // Predicated region
    $region26: #{tpu_custom_call.1} parent=1 // pred_check
      _
    $region27: #{tpu_custom_call.1} parent=1 // pred_check_branch
      %48 = sbr.rel (0) target = $region29
    $region28: #{tpu_custom_call.1} parent=1 // pred_region
      %49 = dma.done [#allocation4], 24576
    $region29: #{tpu_custom_call.1} parent=1 // pred_fallthru
      _
    // Predicated region
    $region30: #{tpu_custom_call.1} parent=1 // pred_check
      _
    $region31: #{tpu_custom_call.1} parent=1 // pred_check_branch
      %51 = sbr.rel (0) target = $region33
    $region32: #{tpu_custom_call.1} parent=1 // pred_region
      %52 = dma.done [#allocation7], 24576
    $region33: #{tpu_custom_call.1} parent=1 // pred_fallthru
      _
    %v53 = vld [vmem:[%s0] sm:$0x77]
    %v54 = vld [vmem:[%s0 + $0x8] sm:$0x77]
    %v55 = vld [vmem:[%s0 + $0x10] sm:$0x77]
    %v56 = vld [vmem:[%s0 + $0x18] sm:$0x77]
    %v61 = vcombine.high %v53, %v53
    %v62 = vcombine.high %v54, %v54
    %v63 = vcombine.high %v55, %v55
    %v64 = vcombine.high %v56, %v56
    %vm69 = vcmask 1042432
    %v70 = vsel %vm69, %v53, 0.0
    %v71 = vrot.slane %v70, 4
    %v72 = vadd.f32 %v70, %v71
    %v73 = vrot.slane %v72, 2
    %v74 = vadd.f32 %v72, %v73
    %v75 = vrot.slane %v74, 1
    %v76 = vadd.f32 %v74, %v75
    %v77 = vsel %vm69, %v61, 0.0
    %v78 = vrot.slane %v77, 4
    %v79 = vadd.f32 %v77, %v78
    %v80 = vrot.slane %v79, 2
    %v81 = vadd.f32 %v79, %v80
    %v82 = vrot.slane %v81, 1
    %v83 = vadd.f32 %v81, %v82
    %v84 = vsel %vm69, %v54, 0.0
    %v85 = vrot.slane %v84, 4
    %v86 = vadd.f32 %v84, %v85
    %v87 = vrot.slane %v86, 2
    %v88 = vadd.f32 %v86, %v87
    %v89 = vrot.slane %v88, 1
    %v90 = vadd.f32 %v88, %v89
    %v91 = vsel %vm69, %v62, 0.0
    %v92 = vrot.slane %v91, 4
    %v93 = vadd.f32 %v91, %v92
    %v94 = vrot.slane %v93, 2
    %v95 = vadd.f32 %v93, %v94
    %v96 = vrot.slane %v95, 1
    %v97 = vadd.f32 %v95, %v96
    %v98 = vsel %vm69, %v55, 0.0
    %v99 = vrot.slane %v98, 4
    %v100 = vadd.f32 %v98, %v99
    %v101 = vrot.slane %v100, 2
    %v102 = vadd.f32 %v100, %v101
    %v103 = vrot.slane %v102, 1
    %v104 = vadd.f32 %v102, %v103
    %v105 = vsel %vm69, %v63, 0.0
    %v106 = vrot.slane %v105, 4
    %v107 = vadd.f32 %v105, %v106
    %v108 = vrot.slane %v107, 2
    %v109 = vadd.f32 %v107, %v108
    %v110 = vrot.slane %v109, 1
    %v111 = vadd.f32 %v109, %v110
    %v112 = vsel %vm69, %v56, 0.0
    %v113 = vrot.slane %v112, 4
    %v114 = vadd.f32 %v112, %v113
    %v115 = vrot.slane %v114, 2
    %v116 = vadd.f32 %v114, %v115
    %v117 = vrot.slane %v116, 1
    %v118 = vadd.f32 %v116, %v117
    %v119 = vsel %vm69, %v64, 0.0
    %v120 = vrot.slane %v119, 4
    %v121 = vadd.f32 %v119, %v120
    %v122 = vrot.slane %v121, 2
    %v123 = vadd.f32 %v121, %v122
    %v124 = vrot.slane %v123, 1
    %v125 = vadd.f32 %v123, %v124
    %v126 = vld [vmem:[#allocation3] sm:$0xff]
    %v127 = vld [vmem:[#allocation3 + $0x8] sm:$0xff]
    %v128 = vld [vmem:[#allocation3 + $0x10] sm:$0xff]
    %v129 = vld [vmem:[#allocation3 + $0x18] sm:$0xff]
    %v130 = vld [vmem:[#allocation3 + $0x20] sm:$0xff]
    %v131 = vld [vmem:[#allocation3 + $0x28] sm:$0xff]
    %v132 = vld [vmem:[#allocation3 + $0x30] sm:$0xff]
    %v133 = vld [vmem:[#allocation3 + $0x38] sm:$0xff]
    %v134 = vld [vmem:[#allocation3 + $0x40] sm:$0xff]
    %v135 = vld [vmem:[#allocation3 + $0x48] sm:$0xff]
    %v136 = vld [vmem:[#allocation3 + $0x50] sm:$0xff]
    %v137 = vld [vmem:[#allocation3 + $0x58] sm:$0xff]
    %v138 = vld [vmem:[#allocation3 + $0x60] sm:$0xff]
    %v139 = vld [vmem:[#allocation3 + $0x68] sm:$0xff]
    %v140 = vld [vmem:[#allocation3 + $0x70] sm:$0xff]
    %v141 = vld [vmem:[#allocation3 + $0x78] sm:$0xff]
    %v142 = vld [vmem:[#allocation3 + $0x80] sm:$0xff]
    %v143 = vld [vmem:[#allocation3 + $0x88] sm:$0xff]
    %v144 = vld [vmem:[#allocation3 + $0x90] sm:$0xff]
    %v145 = vld [vmem:[#allocation3 + $0x98] sm:$0xff]
    %v146 = vld [vmem:[#allocation3 + $0xa0] sm:$0xff]
    %v147 = vld [vmem:[#allocation3 + $0xa8] sm:$0xff]
    %v148 = vld [vmem:[#allocation3 + $0xb0] sm:$0xff]
    %v149 = vld [vmem:[#allocation3 + $0xb8] sm:$0xff]
    %v150 = vld [vmem:[#allocation3 + $0xc0] sm:$0xff]
    %v151 = vld [vmem:[#allocation3 + $0xc8] sm:$0xff]
    %v152 = vld [vmem:[#allocation3 + $0xd0] sm:$0xff]
    %v153 = vld [vmem:[#allocation3 + $0xd8] sm:$0xff]
    %v154 = vld [vmem:[#allocation3 + $0xe0] sm:$0xff]
    %v155 = vld [vmem:[#allocation3 + $0xe8] sm:$0xff]
    %v156 = vld [vmem:[#allocation3 + $0xf0] sm:$0xff]
    %v157 = vld [vmem:[#allocation3 + $0xf8] sm:$0xff]
    %v158 = vld [vmem:[#allocation3 + $0x100] sm:$0xff]
    %v159 = vld [vmem:[#allocation3 + $0x108] sm:$0xff]
    %v160 = vld [vmem:[#allocation3 + $0x110] sm:$0xff]
    %v161 = vld [vmem:[#allocation3 + $0x118] sm:$0xff]
    %v162 = vld [vmem:[#allocation3 + $0x120] sm:$0xff]
    %v163 = vld [vmem:[#allocation3 + $0x128] sm:$0xff]
    %v164 = vld [vmem:[#allocation3 + $0x130] sm:$0xff]
    %v165 = vld [vmem:[#allocation3 + $0x138] sm:$0xff]
    %v166 = vld [vmem:[#allocation3 + $0x140] sm:$0xff]
    %v167 = vld [vmem:[#allocation3 + $0x148] sm:$0xff]
    %v168 = vld [vmem:[#allocation3 + $0x150] sm:$0xff]
    %v169 = vld [vmem:[#allocation3 + $0x158] sm:$0xff]
    %v170 = vld [vmem:[#allocation3 + $0x160] sm:$0xff]
    %v171 = vld [vmem:[#allocation3 + $0x168] sm:$0xff]
    %v172 = vld [vmem:[#allocation3 + $0x170] sm:$0xff]
    %v173 = vld [vmem:[#allocation3 + $0x178] sm:$0xff]
    %v174 = vld [vmem:[#allocation3 + $0x180] sm:$0xff]
    %v175 = vld [vmem:[#allocation3 + $0x188] sm:$0xff]
    %v176 = vld [vmem:[#allocation3 + $0x190] sm:$0xff]
    %v177 = vld [vmem:[#allocation3 + $0x198] sm:$0xff]
    %v178 = vld [vmem:[#allocation3 + $0x1a0] sm:$0xff]
    %v179 = vld [vmem:[#allocation3 + $0x1a8] sm:$0xff]
    %v180 = vld [vmem:[#allocation3 + $0x1b0] sm:$0xff]
    %v181 = vld [vmem:[#allocation3 + $0x1b8] sm:$0xff]
    %v182 = vld [vmem:[#allocation3 + $0x1c0] sm:$0xff]
    %v183 = vld [vmem:[#allocation3 + $0x1c8] sm:$0xff]
    %v184 = vld [vmem:[#allocation3 + $0x1d0] sm:$0xff]
    %v185 = vld [vmem:[#allocation3 + $0x1d8] sm:$0xff]
    %v186 = vld [vmem:[#allocation3 + $0x1e0] sm:$0xff]
    %v187 = vld [vmem:[#allocation3 + $0x1e8] sm:$0xff]
    %v188 = vld [vmem:[#allocation3 + $0x1f0] sm:$0xff]
    %v189 = vld [vmem:[#allocation3 + $0x1f8] sm:$0xff]
    %v190 = vld [vmem:[#allocation3 + $0x200] sm:$0xff]
    %v191 = vld [vmem:[#allocation3 + $0x208] sm:$0xff]
    %v192 = vld [vmem:[#allocation3 + $0x210] sm:$0xff]
    %v193 = vld [vmem:[#allocation3 + $0x218] sm:$0xff]
    %v194 = vld [vmem:[#allocation3 + $0x220] sm:$0xff]
    %v195 = vld [vmem:[#allocation3 + $0x228] sm:$0xff]
    %v196 = vld [vmem:[#allocation3 + $0x230] sm:$0xff]
    %v197 = vld [vmem:[#allocation3 + $0x238] sm:$0xff]
    %v198 = vld [vmem:[#allocation3 + $0x240] sm:$0xff]
    %v199 = vld [vmem:[#allocation3 + $0x248] sm:$0xff]
    %v200 = vld [vmem:[#allocation3 + $0x250] sm:$0xff]
    %v201 = vld [vmem:[#allocation3 + $0x258] sm:$0xff]
    %v202 = vld [vmem:[#allocation3 + $0x260] sm:$0xff]
    %v203 = vld [vmem:[#allocation3 + $0x268] sm:$0xff]
    %v204 = vld [vmem:[#allocation3 + $0x270] sm:$0xff]
    %v205 = vld [vmem:[#allocation3 + $0x278] sm:$0xff]
    %v206 = vld [vmem:[#allocation3 + $0x280] sm:$0xff]
    %v207 = vld [vmem:[#allocation3 + $0x288] sm:$0xff]
    %v208 = vld [vmem:[#allocation3 + $0x290] sm:$0xff]
    %v209 = vld [vmem:[#allocation3 + $0x298] sm:$0xff]
    %v210 = vld [vmem:[#allocation3 + $0x2a0] sm:$0xff]
    %v211 = vld [vmem:[#allocation3 + $0x2a8] sm:$0xff]
    %v212 = vld [vmem:[#allocation3 + $0x2b0] sm:$0xff]
    %v213 = vld [vmem:[#allocation3 + $0x2b8] sm:$0xff]
    %v214 = vld [vmem:[#allocation3 + $0x2c0] sm:$0xff]
    %v215 = vld [vmem:[#allocation3 + $0x2c8] sm:$0xff]
    %v216 = vld [vmem:[#allocation3 + $0x2d0] sm:$0xff]
    %v217 = vld [vmem:[#allocation3 + $0x2d8] sm:$0xff]
    %v218 = vld [vmem:[#allocation3 + $0x2e0] sm:$0xff]
    %v219 = vld [vmem:[#allocation3 + $0x2e8] sm:$0xff]
    %v220 = vld [vmem:[#allocation3 + $0x2f0] sm:$0xff]
    %v221 = vld [vmem:[#allocation3 + $0x2f8] sm:$0xff]
    %v222 = vld [vmem:[#allocation3 + $0x300] sm:$0xff]
    %v223 = vld [vmem:[#allocation3 + $0x308] sm:$0xff]
    %v224 = vld [vmem:[#allocation3 + $0x310] sm:$0xff]
    %v225 = vld [vmem:[#allocation3 + $0x318] sm:$0xff]
    %v226 = vld [vmem:[#allocation3 + $0x320] sm:$0xff]
    %v227 = vld [vmem:[#allocation3 + $0x328] sm:$0xff]
    %v228 = vld [vmem:[#allocation3 + $0x330] sm:$0xff]
    %v229 = vld [vmem:[#allocation3 + $0x338] sm:$0xff]
    %v230 = vld [vmem:[#allocation3 + $0x340] sm:$0xff]
    %v231 = vld [vmem:[#allocation3 + $0x348] sm:$0xff]
    %v232 = vld [vmem:[#allocation3 + $0x350] sm:$0xff]
    %v233 = vld [vmem:[#allocation3 + $0x358] sm:$0xff]
    %v234 = vld [vmem:[#allocation3 + $0x360] sm:$0xff]
    %v235 = vld [vmem:[#allocation3 + $0x368] sm:$0xff]
    %v236 = vld [vmem:[#allocation3 + $0x370] sm:$0xff]
    %v237 = vld [vmem:[#allocation3 + $0x378] sm:$0xff]
    %v238 = vld [vmem:[#allocation3 + $0x380] sm:$0xff]
    %v239 = vld [vmem:[#allocation3 + $0x388] sm:$0xff]
    %v240 = vld [vmem:[#allocation3 + $0x390] sm:$0xff]
    %v241 = vld [vmem:[#allocation3 + $0x398] sm:$0xff]
    %v242 = vld [vmem:[#allocation3 + $0x3a0] sm:$0xff]
    %v243 = vld [vmem:[#allocation3 + $0x3a8] sm:$0xff]
    %v244 = vld [vmem:[#allocation3 + $0x3b0] sm:$0xff]
    %v245 = vld [vmem:[#allocation3 + $0x3b8] sm:$0xff]
    %v246 = vld [vmem:[#allocation3 + $0x3c0] sm:$0xff]
    %v247 = vld [vmem:[#allocation3 + $0x3c8] sm:$0xff]
    %v248 = vld [vmem:[#allocation3 + $0x3d0] sm:$0xff]
    %v249 = vld [vmem:[#allocation3 + $0x3d8] sm:$0xff]
    %v250 = vld [vmem:[#allocation3 + $0x3e0] sm:$0xff]
    %v251 = vld [vmem:[#allocation3 + $0x3e8] sm:$0xff]
    %v252 = vld [vmem:[#allocation3 + $0x3f0] sm:$0xff]
    %v253 = vld [vmem:[#allocation3 + $0x3f8] sm:$0xff]
    %v254 = vld [vmem:[#allocation3 + $0x400] sm:$0xff]
    %v255 = vld [vmem:[#allocation3 + $0x408] sm:$0xff]
    %v256 = vld [vmem:[#allocation3 + $0x410] sm:$0xff]
    %v257 = vld [vmem:[#allocation3 + $0x418] sm:$0xff]
    %v258 = vld [vmem:[#allocation3 + $0x420] sm:$0xff]
    %v259 = vld [vmem:[#allocation3 + $0x428] sm:$0xff]
    %v260 = vld [vmem:[#allocation3 + $0x430] sm:$0xff]
    %v261 = vld [vmem:[#allocation3 + $0x438] sm:$0xff]
    %v262 = vld [vmem:[#allocation3 + $0x440] sm:$0xff]
    %v263 = vld [vmem:[#allocation3 + $0x448] sm:$0xff]
    %v264 = vld [vmem:[#allocation3 + $0x450] sm:$0xff]
    %v265 = vld [vmem:[#allocation3 + $0x458] sm:$0xff]
    %v266 = vld [vmem:[#allocation3 + $0x460] sm:$0xff]
    %v267 = vld [vmem:[#allocation3 + $0x468] sm:$0xff]
    %v268 = vld [vmem:[#allocation3 + $0x470] sm:$0xff]
    %v269 = vld [vmem:[#allocation3 + $0x478] sm:$0xff]
    %v270 = vld [vmem:[#allocation3 + $0x480] sm:$0xff]
    %v271 = vld [vmem:[#allocation3 + $0x488] sm:$0xff]
    %v272 = vld [vmem:[#allocation3 + $0x490] sm:$0xff]
    %v273 = vld [vmem:[#allocation3 + $0x498] sm:$0xff]
    %v274 = vld [vmem:[#allocation3 + $0x4a0] sm:$0xff]
    %v275 = vld [vmem:[#allocation3 + $0x4a8] sm:$0xff]
    %v276 = vld [vmem:[#allocation3 + $0x4b0] sm:$0xff]
    %v277 = vld [vmem:[#allocation3 + $0x4b8] sm:$0xff]
    %v278 = vld [vmem:[#allocation3 + $0x4c0] sm:$0xff]
    %v279 = vld [vmem:[#allocation3 + $0x4c8] sm:$0xff]
    %v280 = vld [vmem:[#allocation3 + $0x4d0] sm:$0xff]
    %v281 = vld [vmem:[#allocation3 + $0x4d8] sm:$0xff]
    %v282 = vld [vmem:[#allocation3 + $0x4e0] sm:$0xff]
    %v283 = vld [vmem:[#allocation3 + $0x4e8] sm:$0xff]
    %v284 = vld [vmem:[#allocation3 + $0x4f0] sm:$0xff]
    %v285 = vld [vmem:[#allocation3 + $0x4f8] sm:$0xff]
    %v286 = vld [vmem:[#allocation3 + $0x500] sm:$0xff]
    %v287 = vld [vmem:[#allocation3 + $0x508] sm:$0xff]
    %v288 = vld [vmem:[#allocation3 + $0x510] sm:$0xff]
    %v289 = vld [vmem:[#allocation3 + $0x518] sm:$0xff]
    %v290 = vld [vmem:[#allocation3 + $0x520] sm:$0xff]
    %v291 = vld [vmem:[#allocation3 + $0x528] sm:$0xff]
    %v292 = vld [vmem:[#allocation3 + $0x530] sm:$0xff]
    %v293 = vld [vmem:[#allocation3 + $0x538] sm:$0xff]
    %v294 = vld [vmem:[#allocation3 + $0x540] sm:$0xff]
    %v295 = vld [vmem:[#allocation3 + $0x548] sm:$0xff]
    %v296 = vld [vmem:[#allocation3 + $0x550] sm:$0xff]
    %v297 = vld [vmem:[#allocation3 + $0x558] sm:$0xff]
    %v298 = vld [vmem:[#allocation3 + $0x560] sm:$0xff]
    %v299 = vld [vmem:[#allocation3 + $0x568] sm:$0xff]
    %v300 = vld [vmem:[#allocation3 + $0x570] sm:$0xff]
    %v301 = vld [vmem:[#allocation3 + $0x578] sm:$0xff]
    %v302 = vld [vmem:[#allocation3 + $0x580] sm:$0xff]
    %v303 = vld [vmem:[#allocation3 + $0x588] sm:$0xff]
    %v304 = vld [vmem:[#allocation3 + $0x590] sm:$0xff]
    %v305 = vld [vmem:[#allocation3 + $0x598] sm:$0xff]
    %v306 = vld [vmem:[#allocation3 + $0x5a0] sm:$0xff]
    %v307 = vld [vmem:[#allocation3 + $0x5a8] sm:$0xff]
    %v308 = vld [vmem:[#allocation3 + $0x5b0] sm:$0xff]
    %v309 = vld [vmem:[#allocation3 + $0x5b8] sm:$0xff]
    %v310 = vld [vmem:[#allocation3 + $0x5c0] sm:$0xff]
    %v311 = vld [vmem:[#allocation3 + $0x5c8] sm:$0xff]
    %v312 = vld [vmem:[#allocation3 + $0x5d0] sm:$0xff]
    %v313 = vld [vmem:[#allocation3 + $0x5d8] sm:$0xff]
    %v314 = vld [vmem:[#allocation3 + $0x5e0] sm:$0xff]
    %v315 = vld [vmem:[#allocation3 + $0x5e8] sm:$0xff]
    %v316 = vld [vmem:[#allocation3 + $0x5f0] sm:$0xff]
    %v317 = vld [vmem:[#allocation3 + $0x5f8] sm:$0xff]
    %v318 = vld [vmem:[%s2] sm:$0x7]
    %v320 = vlaneseq
    %v321 = vshrl.u32 %v320, 7
    %v322 = vsub.s32 0, %v321
    %v323 = vrot.slane %v318, %v322
    %v324 = vlaneseq
    %v325 = vshrl.u32 %v324, 7
    %v326 = vsub.s32 1, %v325
    %v327 = vrot.slane %v318, %v326
    %v328 = vlaneseq
    %v329 = vshrl.u32 %v328, 7
    %v330 = vsub.s32 2, %v329
    %v331 = vrot.slane %v318, %v330
    %vm343 = vcmask 1041409
    %v344 = vsel %vm343, %v104, %v76
    %v345 = vsel %vm343, %v111, %v83
    %v346 = vsel %vm343, %v118, %v90
    %v347 = vsel %vm343, %v125, %v97
    %352 = vmatprep.subr.mxu0 %v172
    %353 = vmatpush1.msra.mxu0 %v171
    %354 = vmatprep.subr.mxu0 %v169
    %355 = vmatpush1.msra.mxu0 %v168
    %356 = vmatprep.subr.mxu0 %v166
    %357 = vmatpush1.msra.mxu0 %v165
    %358 = vmatprep.subr.mxu0 %v163
    %359 = vmatpush1.msra.mxu0 %v162
    %360 = vmatprep.subr.mxu0 %v160
    %361 = vmatpush1.msra.mxu0 %v159
    %362 = vmatprep.subr.mxu0 %v157
    %363 = vmatpush1.msra.mxu0 %v156
    %364 = vmatprep.subr.mxu0 %v154
    %365 = vmatpush1.msra.mxu0 %v153
    %366 = vmatprep.subr.mxu0 %v151
    %367 = vmatpush1.msra.mxu0 %v150
    %368 = vmatprep.subr.mxu0 %v148
    %369 = vmatpush1.msra.mxu0 %v147
    %370 = vmatprep.subr.mxu0 %v145
    %371 = vmatpush1.msra.mxu0 %v144
    %372 = vmatprep.subr.mxu0 %v142
    %373 = vmatpush1.msra.mxu0 %v141
    %374 = vmatprep.subr.mxu0 %v139
    %375 = vmatpush1.msra.mxu0 %v138
    %376 = vmatprep.subr.mxu0 %v136
    %377 = vmatpush1.msra.mxu0 %v135
    %378 = vmatprep.subr.mxu0 %v133
    %379 = vmatpush1.msra.mxu0 %v132
    %380 = vmatprep.subr.mxu0 %v130
    %381 = vmatpush1.msra.mxu0 %v129
    %382 = vmatprep.subr.mxu0 %v127
    %383 = vmatpush1.msra.mxu0 %v126
    %384 = vmatprep.subr.mxu0 %v220
    %385 = vmatpush2.msra.mxu0 %v219
    %386 = vmatprep.subr.mxu0 %v217
    %387 = vmatpush2.msra.mxu0 %v216
    %388 = vmatprep.subr.mxu0 %v214
    %389 = vmatpush2.msra.mxu0 %v213
    %390 = vmatprep.subr.mxu0 %v211
    %391 = vmatpush2.msra.mxu0 %v210
    %392 = vmatprep.subr.mxu0 %v208
    %393 = vmatpush2.msra.mxu0 %v207
    %394 = vmatprep.subr.mxu0 %v205
    %395 = vmatpush2.msra.mxu0 %v204
    %396 = vmatprep.subr.mxu0 %v202
    %397 = vmatpush2.msra.mxu0 %v201
    %398 = vmatprep.subr.mxu0 %v199
    %399 = vmatpush2.msra.mxu0 %v198
    %400 = vmatprep.subr.mxu0 %v196
    %401 = vmatpush2.msra.mxu0 %v195
    %402 = vmatprep.subr.mxu0 %v193
    %403 = vmatpush2.msra.mxu0 %v192
    %404 = vmatprep.subr.mxu0 %v190
    %405 = vmatpush2.msra.mxu0 %v189
    %406 = vmatprep.subr.mxu0 %v187
    %407 = vmatpush2.msra.mxu0 %v186
    %408 = vmatprep.subr.mxu0 %v184
    %409 = vmatpush2.msra.mxu0 %v183
    %410 = vmatprep.subr.mxu0 %v181
    %411 = vmatpush2.msra.mxu0 %v180
    %412 = vmatprep.subr.mxu0 %v178
    %413 = vmatpush2.msra.mxu0 %v177
    %414 = vmatprep.subr.mxu0 %v175
    %415 = vmatpush2.msra.mxu0 %v174
    %416 = vmatprep.mubr.f32.mxu0 %v345
    %417 = vmatmul.mubr.f32.gmra.mxu0 %v344
    %v418 = vpop.f32.mrf.mxu0
    %v419 = vadd.f32 %v323, %v418
    %v420 = vpop.f32.mrf.mxu0
    %v421 = vadd.f32 %v327, %v420
    %422 = vdwg.mxu0
    %423 = vmatprep.subr.mxu0 %v268
    %424 = vmatpush1.msra.mxu0 %v267
    %425 = vmatprep.subr.mxu0 %v265
    %426 = vmatpush1.msra.mxu0 %v264
    %427 = vmatprep.subr.mxu0 %v262
    %428 = vmatpush1.msra.mxu0 %v261
    %429 = vmatprep.subr.mxu0 %v259
    %430 = vmatpush1.msra.mxu0 %v258
    %431 = vmatprep.subr.mxu0 %v256
    %432 = vmatpush1.msra.mxu0 %v255
    %433 = vmatprep.subr.mxu0 %v253
    %434 = vmatpush1.msra.mxu0 %v252
    %435 = vmatprep.subr.mxu0 %v250
    %436 = vmatpush1.msra.mxu0 %v249
    %437 = vmatprep.subr.mxu0 %v247
    %438 = vmatpush1.msra.mxu0 %v246
    %439 = vmatprep.subr.mxu0 %v244
    %440 = vmatpush1.msra.mxu0 %v243
    %441 = vmatprep.subr.mxu0 %v241
    %442 = vmatpush1.msra.mxu0 %v240
    %443 = vmatprep.subr.mxu0 %v238
    %444 = vmatpush1.msra.mxu0 %v237
    %445 = vmatprep.subr.mxu0 %v235
    %446 = vmatpush1.msra.mxu0 %v234
    %447 = vmatprep.subr.mxu0 %v232
    %448 = vmatpush1.msra.mxu0 %v231
    %449 = vmatprep.subr.mxu0 %v229
    %450 = vmatpush1.msra.mxu0 %v228
    %451 = vmatprep.subr.mxu0 %v226
    %452 = vmatpush1.msra.mxu0 %v225
    %453 = vmatprep.subr.mxu0 %v223
    %454 = vmatpush1.msra.mxu0 %v222
    %455 = vmatprep.subr.mxu0 %v316
    %456 = vmatpush2.msra.mxu0 %v315
    %457 = vmatprep.subr.mxu0 %v313
    %458 = vmatpush2.msra.mxu0 %v312
    %459 = vmatprep.subr.mxu0 %v310
    %460 = vmatpush2.msra.mxu0 %v309
    %461 = vmatprep.subr.mxu0 %v307
    %462 = vmatpush2.msra.mxu0 %v306
    %463 = vmatprep.subr.mxu0 %v304
    %464 = vmatpush2.msra.mxu0 %v303
    %465 = vmatprep.subr.mxu0 %v301
    %466 = vmatpush2.msra.mxu0 %v300
    %467 = vmatprep.subr.mxu0 %v298
    %468 = vmatpush2.msra.mxu0 %v297
    %469 = vmatprep.subr.mxu0 %v295
    %470 = vmatpush2.msra.mxu0 %v294
    %471 = vmatprep.subr.mxu0 %v292
    %472 = vmatpush2.msra.mxu0 %v291
    %473 = vmatprep.subr.mxu0 %v289
    %474 = vmatpush2.msra.mxu0 %v288
    %475 = vmatprep.subr.mxu0 %v286
    %476 = vmatpush2.msra.mxu0 %v285
    %477 = vmatprep.subr.mxu0 %v283
    %478 = vmatpush2.msra.mxu0 %v282
    %479 = vmatprep.subr.mxu0 %v280
    %480 = vmatpush2.msra.mxu0 %v279
    %481 = vmatprep.subr.mxu0 %v277
    %482 = vmatpush2.msra.mxu0 %v276
    %483 = vmatprep.subr.mxu0 %v274
    %484 = vmatpush2.msra.mxu0 %v273
    %485 = vmatprep.subr.mxu0 %v271
    %486 = vmatpush2.msra.mxu0 %v270
    %487 = vmatprep.mubr.f32.mxu0 %v347
    %488 = vmatmul.mubr.f32.gmra.mxu0 %v346
    %v489 = vpop.f32.mrf.mxu0
    %v490 = vadd.f32 %v419, %v489
    %v491 = vpop.f32.mrf.mxu0
    %v492 = vadd.f32 %v421, %v491
    %493 = vdwg.mxu0
    %494 = vmatprep.subr.mxu0 0.0
    %495 = vmatpush1.msra.mxu0 %v173
    %496 = vmatprep.subr.mxu0 0.0
    %497 = vmatpush1.msra.mxu0 %v170
    %498 = vmatprep.subr.mxu0 0.0
    %499 = vmatpush1.msra.mxu0 %v167
    %500 = vmatprep.subr.mxu0 0.0
    %501 = vmatpush1.msra.mxu0 %v164
    %502 = vmatprep.subr.mxu0 0.0
    %503 = vmatpush1.msra.mxu0 %v161
    %504 = vmatprep.subr.mxu0 0.0
    %505 = vmatpush1.msra.mxu0 %v158
    %506 = vmatprep.subr.mxu0 0.0
    %507 = vmatpush1.msra.mxu0 %v155
    %508 = vmatprep.subr.mxu0 0.0
    %509 = vmatpush1.msra.mxu0 %v152
    %510 = vmatprep.subr.mxu0 0.0
    %511 = vmatpush1.msra.mxu0 %v149
    %512 = vmatprep.subr.mxu0 0.0
    %513 = vmatpush1.msra.mxu0 %v146
    %514 = vmatprep.subr.mxu0 0.0
    %515 = vmatpush1.msra.mxu0 %v143
    %516 = vmatprep.subr.mxu0 0.0
    %517 = vmatpush1.msra.mxu0 %v140
    %518 = vmatprep.subr.mxu0 0.0
    %519 = vmatpush1.msra.mxu0 %v137
    %520 = vmatprep.subr.mxu0 0.0
    %521 = vmatpush1.msra.mxu0 %v134
    %522 = vmatprep.subr.mxu0 0.0
    %523 = vmatpush1.msra.mxu0 %v131
    %524 = vmatprep.subr.mxu0 0.0
    %525 = vmatpush1.msra.mxu0 %v128
    %526 = vmatprep.subr.mxu0 0.0
    %527 = vmatpush2.msra.mxu0 %v221
    %528 = vmatprep.subr.mxu0 0.0
    %529 = vmatpush2.msra.mxu0 %v218
    %530 = vmatprep.subr.mxu0 0.0
    %531 = vmatpush2.msra.mxu0 %v215
    %532 = vmatprep.subr.mxu0 0.0
    %533 = vmatpush2.msra.mxu0 %v212
    %534 = vmatprep.subr.mxu0 0.0
    %535 = vmatpush2.msra.mxu0 %v209
    %536 = vmatprep.subr.mxu0 0.0
    %537 = vmatpush2.msra.mxu0 %v206
    %538 = vmatprep.subr.mxu0 0.0
    %539 = vmatpush2.msra.mxu0 %v203
    %540 = vmatprep.subr.mxu0 0.0
    %541 = vmatpush2.msra.mxu0 %v200
    %542 = vmatprep.subr.mxu0 0.0
    %543 = vmatpush2.msra.mxu0 %v197
    %544 = vmatprep.subr.mxu0 0.0
    %545 = vmatpush2.msra.mxu0 %v194
    %546 = vmatprep.subr.mxu0 0.0
    %547 = vmatpush2.msra.mxu0 %v191
    %548 = vmatprep.subr.mxu0 0.0
    %549 = vmatpush2.msra.mxu0 %v188
    %550 = vmatprep.subr.mxu0 0.0
    %551 = vmatpush2.msra.mxu0 %v185
    %552 = vmatprep.subr.mxu0 0.0
    %553 = vmatpush2.msra.mxu0 %v182
    %554 = vmatprep.subr.mxu0 0.0
    %555 = vmatpush2.msra.mxu0 %v179
    %556 = vmatprep.subr.mxu0 0.0
    %557 = vmatpush2.msra.mxu0 %v176
    %558 = vmatprep.mubr.f32.mxu0 %v345
    %559 = vmatmul.mubr.f32.gmra.mxu0 %v344
    %v560 = vpop.f32.mrf.mxu0
    %v561 = vadd.f32 %v331, %v560
    %v562 = vpop.f32.mrf.mxu0
    %563 = vdwg.mxu0
    %564 = vmatprep.subr.mxu0 0.0
    %565 = vmatpush1.msra.mxu0 %v269
    %566 = vmatprep.subr.mxu0 0.0
    %567 = vmatpush1.msra.mxu0 %v266
    %568 = vmatprep.subr.mxu0 0.0
    %569 = vmatpush1.msra.mxu0 %v263
    %570 = vmatprep.subr.mxu0 0.0
    %571 = vmatpush1.msra.mxu0 %v260
    %572 = vmatprep.subr.mxu0 0.0
    %573 = vmatpush1.msra.mxu0 %v257
    %574 = vmatprep.subr.mxu0 0.0
    %575 = vmatpush1.msra.mxu0 %v254
    %576 = vmatprep.subr.mxu0 0.0
    %577 = vmatpush1.msra.mxu0 %v251
    %578 = vmatprep.subr.mxu0 0.0
    %579 = vmatpush1.msra.mxu0 %v248
    %580 = vmatprep.subr.mxu0 0.0
    %581 = vmatpush1.msra.mxu0 %v245
    %582 = vmatprep.subr.mxu0 0.0
    %583 = vmatpush1.msra.mxu0 %v242
    %584 = vmatprep.subr.mxu0 0.0
    %585 = vmatpush1.msra.mxu0 %v239
    %586 = vmatprep.subr.mxu0 0.0
    %587 = vmatpush1.msra.mxu0 %v236
    %588 = vmatprep.subr.mxu0 0.0
    %589 = vmatpush1.msra.mxu0 %v233
    %590 = vmatprep.subr.mxu0 0.0
    %591 = vmatpush1.msra.mxu0 %v230
    %592 = vmatprep.subr.mxu0 0.0
    %593 = vmatpush1.msra.mxu0 %v227
    %594 = vmatprep.subr.mxu0 0.0
    %595 = vmatpush1.msra.mxu0 %v224
    %596 = vmatprep.subr.mxu0 0.0
    %597 = vmatpush2.msra.mxu0 %v317
    %598 = vmatprep.subr.mxu0 0.0
    %599 = vmatpush2.msra.mxu0 %v314
    %600 = vmatprep.subr.mxu0 0.0
    %601 = vmatpush2.msra.mxu0 %v311
    %602 = vmatprep.subr.mxu0 0.0
    %603 = vmatpush2.msra.mxu0 %v308
    %604 = vmatprep.subr.mxu0 0.0
    %605 = vmatpush2.msra.mxu0 %v305
    %606 = vmatprep.subr.mxu0 0.0
    %607 = vmatpush2.msra.mxu0 %v302
    %608 = vmatprep.subr.mxu0 0.0
    %609 = vmatpush2.msra.mxu0 %v299
    %610 = vmatprep.subr.mxu0 0.0
    %611 = vmatpush2.msra.mxu0 %v296
    %612 = vmatprep.subr.mxu0 0.0
    %613 = vmatpush2.msra.mxu0 %v293
    %614 = vmatprep.subr.mxu0 0.0
    %615 = vmatpush2.msra.mxu0 %v290
    %616 = vmatprep.subr.mxu0 0.0
    %617 = vmatpush2.msra.mxu0 %v287
    %618 = vmatprep.subr.mxu0 0.0
    %619 = vmatpush2.msra.mxu0 %v284
    %620 = vmatprep.subr.mxu0 0.0
    %621 = vmatpush2.msra.mxu0 %v281
    %622 = vmatprep.subr.mxu0 0.0
    %623 = vmatpush2.msra.mxu0 %v278
    %624 = vmatprep.subr.mxu0 0.0
    %625 = vmatpush2.msra.mxu0 %v275
    %626 = vmatprep.subr.mxu0 0.0
    %627 = vmatpush2.msra.mxu0 %v272
    %628 = vmatprep.mubr.f32.mxu0 %v347
    %629 = vmatmul.mubr.f32.gmra.mxu0 %v346
    %v630 = vpop.f32.mrf.mxu0
    %v631 = vadd.f32 %v561, %v630
    %v632 = vpop.f32.mrf.mxu0
    %633 = vdwg.mxu0
    %v634 = vmax.f32 %v490, 0.0
    %v635 = vmax.f32 %v492, 0.0
    %v636 = vmax.f32 %v631, 0.0
    %v637 = vld [vmem:[#allocation6] sm:$0xff]
    %v638 = vld [vmem:[#allocation6 + $0x8] sm:$0xff]
    %v639 = vld [vmem:[#allocation6 + $0x10] sm:$0xff]
    %v640 = vld [vmem:[#allocation6 + $0x18] sm:$0xff]
    %v641 = vld [vmem:[#allocation6 + $0x20] sm:$0xff]
    %v642 = vld [vmem:[#allocation6 + $0x28] sm:$0xff]
    %v643 = vld [vmem:[#allocation6 + $0x30] sm:$0xff]
    %v644 = vld [vmem:[#allocation6 + $0x38] sm:$0xff]
    %v645 = vld [vmem:[#allocation6 + $0x40] sm:$0xff]
    %v646 = vld [vmem:[#allocation6 + $0x48] sm:$0xff]
    %v647 = vld [vmem:[#allocation6 + $0x50] sm:$0xff]
    %v648 = vld [vmem:[#allocation6 + $0x58] sm:$0xff]
    %v649 = vld [vmem:[#allocation6 + $0x60] sm:$0xff]
    %v650 = vld [vmem:[#allocation6 + $0x68] sm:$0xff]
    %v651 = vld [vmem:[#allocation6 + $0x70] sm:$0xff]
    %v652 = vld [vmem:[#allocation6 + $0x78] sm:$0xff]
    %v653 = vld [vmem:[#allocation6 + $0x80] sm:$0xff]
    %v654 = vld [vmem:[#allocation6 + $0x88] sm:$0xff]
    %v655 = vld [vmem:[#allocation6 + $0x90] sm:$0xff]
    %v656 = vld [vmem:[#allocation6 + $0x98] sm:$0xff]
    %v657 = vld [vmem:[#allocation6 + $0xa0] sm:$0xff]
    %v658 = vld [vmem:[#allocation6 + $0xa8] sm:$0xff]
    %v659 = vld [vmem:[#allocation6 + $0xb0] sm:$0xff]
    %v660 = vld [vmem:[#allocation6 + $0xb8] sm:$0xff]
    %v661 = vld [vmem:[#allocation6 + $0xc0] sm:$0xff]
    %v662 = vld [vmem:[#allocation6 + $0xc8] sm:$0xff]
    %v663 = vld [vmem:[#allocation6 + $0xd0] sm:$0xff]
    %v664 = vld [vmem:[#allocation6 + $0xd8] sm:$0xff]
    %v665 = vld [vmem:[#allocation6 + $0xe0] sm:$0xff]
    %v666 = vld [vmem:[#allocation6 + $0xe8] sm:$0xff]
    %v667 = vld [vmem:[#allocation6 + $0xf0] sm:$0xff]
    %v668 = vld [vmem:[#allocation6 + $0xf8] sm:$0xff]
    %v669 = vld [vmem:[#allocation6 + $0x100] sm:$0xff]
    %v670 = vld [vmem:[#allocation6 + $0x108] sm:$0xff]
    %v671 = vld [vmem:[#allocation6 + $0x110] sm:$0xff]
    %v672 = vld [vmem:[#allocation6 + $0x118] sm:$0xff]
    %v673 = vld [vmem:[#allocation6 + $0x120] sm:$0xff]
    %v674 = vld [vmem:[#allocation6 + $0x128] sm:$0xff]
    %v675 = vld [vmem:[#allocation6 + $0x130] sm:$0xff]
    %v676 = vld [vmem:[#allocation6 + $0x138] sm:$0xff]
    %v677 = vld [vmem:[#allocation6 + $0x140] sm:$0xff]
    %v678 = vld [vmem:[#allocation6 + $0x148] sm:$0xff]
    %v679 = vld [vmem:[#allocation6 + $0x150] sm:$0xff]
    %v680 = vld [vmem:[#allocation6 + $0x158] sm:$0xff]
    %v681 = vld [vmem:[#allocation6 + $0x160] sm:$0xff]
    %v682 = vld [vmem:[#allocation6 + $0x168] sm:$0xff]
    %v683 = vld [vmem:[#allocation6 + $0x170] sm:$0xff]
    %v684 = vld [vmem:[#allocation6 + $0x178] sm:$0xff]
    %v685 = vld [vmem:[#allocation6 + $0x180] sm:$0xff]
    %v686 = vld [vmem:[#allocation6 + $0x188] sm:$0xff]
    %v687 = vld [vmem:[#allocation6 + $0x190] sm:$0xff]
    %v688 = vld [vmem:[#allocation6 + $0x198] sm:$0xff]
    %v689 = vld [vmem:[#allocation6 + $0x1a0] sm:$0xff]
    %v690 = vld [vmem:[#allocation6 + $0x1a8] sm:$0xff]
    %v691 = vld [vmem:[#allocation6 + $0x1b0] sm:$0xff]
    %v692 = vld [vmem:[#allocation6 + $0x1b8] sm:$0xff]
    %v693 = vld [vmem:[#allocation6 + $0x1c0] sm:$0xff]
    %v694 = vld [vmem:[#allocation6 + $0x1c8] sm:$0xff]
    %v695 = vld [vmem:[#allocation6 + $0x1d0] sm:$0xff]
    %v696 = vld [vmem:[#allocation6 + $0x1d8] sm:$0xff]
    %v697 = vld [vmem:[#allocation6 + $0x1e0] sm:$0xff]
    %v698 = vld [vmem:[#allocation6 + $0x1e8] sm:$0xff]
    %v699 = vld [vmem:[#allocation6 + $0x1f0] sm:$0xff]
    %v700 = vld [vmem:[#allocation6 + $0x1f8] sm:$0xff]
    %v701 = vld [vmem:[%s4] sm:$0xf]
    %v703 = vlaneseq
    %v704 = vshrl.u32 %v703, 7
    %v705 = vsub.s32 0, %v704
    %v706 = vrot.slane %v701, %v705
    %v707 = vlaneseq
    %v708 = vshrl.u32 %v707, 7
    %v709 = vsub.s32 1, %v708
    %v710 = vrot.slane %v701, %v709
    %v711 = vlaneseq
    %v712 = vshrl.u32 %v711, 7
    %v713 = vsub.s32 2, %v712
    %v714 = vrot.slane %v701, %v713
    %v715 = vlaneseq
    %v716 = vshrl.u32 %v715, 7
    %v717 = vsub.s32 3, %v716
    %v718 = vrot.slane %v701, %v717
    %723 = vmatprep.subr.mxu0 %v698
    %724 = vmatpush1.msra.mxu0 %v697
    %725 = vmatprep.subr.mxu0 %v694
    %726 = vmatpush1.msra.mxu0 %v693
    %727 = vmatprep.subr.mxu0 %v690
    %728 = vmatpush1.msra.mxu0 %v689
    %729 = vmatprep.subr.mxu0 %v686
    %730 = vmatpush1.msra.mxu0 %v685
    %731 = vmatprep.subr.mxu0 %v682
    %732 = vmatpush1.msra.mxu0 %v681
    %733 = vmatprep.subr.mxu0 %v678
    %734 = vmatpush1.msra.mxu0 %v677
    %735 = vmatprep.subr.mxu0 %v674
    %736 = vmatpush1.msra.mxu0 %v673
    %737 = vmatprep.subr.mxu0 %v670
    %738 = vmatpush1.msra.mxu0 %v669
    %739 = vmatprep.subr.mxu0 %v666
    %740 = vmatpush1.msra.mxu0 %v665
    %741 = vmatprep.subr.mxu0 %v662
    %742 = vmatpush1.msra.mxu0 %v661
    %743 = vmatprep.subr.mxu0 %v658
    %744 = vmatpush1.msra.mxu0 %v657
    %745 = vmatprep.subr.mxu0 %v654
    %746 = vmatpush1.msra.mxu0 %v653
    %747 = vmatprep.subr.mxu0 %v650
    %748 = vmatpush1.msra.mxu0 %v649
    %749 = vmatprep.subr.mxu0 %v646
    %750 = vmatpush1.msra.mxu0 %v645
    %751 = vmatprep.subr.mxu0 %v642
    %752 = vmatpush1.msra.mxu0 %v641
    %753 = vmatprep.subr.mxu0 %v638
    %754 = vmatpush1.msra.mxu0 %v637
    %755 = vmatprep.subr.mxu0 0.0
    %756 = vmatpush2.msra.mxu0 0.0
    %757 = vmatprep.subr.mxu0 0.0
    %758 = vmatpush2.msra.mxu0 0.0
    %759 = vmatprep.subr.mxu0 0.0
    %760 = vmatpush2.msra.mxu0 0.0
    %761 = vmatprep.subr.mxu0 0.0
    %762 = vmatpush2.msra.mxu0 0.0
    %763 = vmatprep.subr.mxu0 0.0
    %764 = vmatpush2.msra.mxu0 0.0
    %765 = vmatprep.subr.mxu0 0.0
    %766 = vmatpush2.msra.mxu0 0.0
    %767 = vmatprep.subr.mxu0 0.0
    %768 = vmatpush2.msra.mxu0 0.0
    %769 = vmatprep.subr.mxu0 0.0
    %770 = vmatpush2.msra.mxu0 0.0
    %771 = vmatprep.subr.mxu0 0.0
    %772 = vmatpush2.msra.mxu0 0.0
    %773 = vmatprep.subr.mxu0 0.0
    %774 = vmatpush2.msra.mxu0 0.0
    %775 = vmatprep.subr.mxu0 0.0
    %776 = vmatpush2.msra.mxu0 0.0
    %777 = vmatprep.subr.mxu0 0.0
    %778 = vmatpush2.msra.mxu0 0.0
    %779 = vmatprep.subr.mxu0 0.0
    %780 = vmatpush2.msra.mxu0 0.0
    %781 = vmatprep.subr.mxu0 0.0
    %782 = vmatpush2.msra.mxu0 0.0
    %783 = vmatprep.subr.mxu0 0.0
    %784 = vmatpush2.msra.mxu0 0.0
    %785 = vmatprep.subr.mxu0 0.0
    %786 = vmatpush2.msra.mxu0 0.0
    %787 = vmatprep.mubr.f32.mxu0 0.0
    %788 = vmatmul.mubr.f32.gmra.mxu0 %v634
    %v789 = vpop.f32.mrf.mxu0
    %v790 = vadd.f32 %v706, %v789
    %v791 = vpop.f32.mrf.mxu0
    %v792 = vadd.f32 %v710, %v791
    %793 = vdwg.mxu0
    %794 = vmatprep.subr.mxu0 %v700
    %795 = vmatpush1.msra.mxu0 %v699
    %796 = vmatprep.subr.mxu0 %v696
    %797 = vmatpush1.msra.mxu0 %v695
    %798 = vmatprep.subr.mxu0 %v692
    %799 = vmatpush1.msra.mxu0 %v691
    %800 = vmatprep.subr.mxu0 %v688
    %801 = vmatpush1.msra.mxu0 %v687
    %802 = vmatprep.subr.mxu0 %v684
    %803 = vmatpush1.msra.mxu0 %v683
    %804 = vmatprep.subr.mxu0 %v680
    %805 = vmatpush1.msra.mxu0 %v679
    %806 = vmatprep.subr.mxu0 %v676
    %807 = vmatpush1.msra.mxu0 %v675
    %808 = vmatprep.subr.mxu0 %v672
    %809 = vmatpush1.msra.mxu0 %v671
    %810 = vmatprep.subr.mxu0 %v668
    %811 = vmatpush1.msra.mxu0 %v667
    %812 = vmatprep.subr.mxu0 %v664
    %813 = vmatpush1.msra.mxu0 %v663
    %814 = vmatprep.subr.mxu0 %v660
    %815 = vmatpush1.msra.mxu0 %v659
    %816 = vmatprep.subr.mxu0 %v656
    %817 = vmatpush1.msra.mxu0 %v655
    %818 = vmatprep.subr.mxu0 %v652
    %819 = vmatpush1.msra.mxu0 %v651
    %820 = vmatprep.subr.mxu0 %v648
    %821 = vmatpush1.msra.mxu0 %v647
    %822 = vmatprep.subr.mxu0 %v644
    %823 = vmatpush1.msra.mxu0 %v643
    %824 = vmatprep.subr.mxu0 %v640
    %825 = vmatpush1.msra.mxu0 %v639
    %826 = vmatprep.subr.mxu0 0.0
    %827 = vmatpush2.msra.mxu0 0.0
    %828 = vmatprep.subr.mxu0 0.0
    %829 = vmatpush2.msra.mxu0 0.0
    %830 = vmatprep.subr.mxu0 0.0
    %831 = vmatpush2.msra.mxu0 0.0
    %832 = vmatprep.subr.mxu0 0.0
    %833 = vmatpush2.msra.mxu0 0.0
    %834 = vmatprep.subr.mxu0 0.0
    %835 = vmatpush2.msra.mxu0 0.0
    %836 = vmatprep.subr.mxu0 0.0
    %837 = vmatpush2.msra.mxu0 0.0
    %838 = vmatprep.subr.mxu0 0.0
    %839 = vmatpush2.msra.mxu0 0.0
    %840 = vmatprep.subr.mxu0 0.0
    %841 = vmatpush2.msra.mxu0 0.0
    %842 = vmatprep.subr.mxu0 0.0
    %843 = vmatpush2.msra.mxu0 0.0
    %844 = vmatprep.subr.mxu0 0.0
    %845 = vmatpush2.msra.mxu0 0.0
    %846 = vmatprep.subr.mxu0 0.0
    %847 = vmatpush2.msra.mxu0 0.0
    %848 = vmatprep.subr.mxu0 0.0
    %849 = vmatpush2.msra.mxu0 0.0
    %850 = vmatprep.subr.mxu0 0.0
    %851 = vmatpush2.msra.mxu0 0.0
    %852 = vmatprep.subr.mxu0 0.0
    %853 = vmatpush2.msra.mxu0 0.0
    %854 = vmatprep.subr.mxu0 0.0
    %855 = vmatpush2.msra.mxu0 0.0
    %856 = vmatprep.subr.mxu0 0.0
    %857 = vmatpush2.msra.mxu0 0.0
    %858 = vmatprep.mubr.f32.mxu0 0.0
    %859 = vmatmul.mubr.f32.gmra.mxu0 %v634
    %v860 = vpop.f32.mrf.mxu0
    %v861 = vadd.f32 %v714, %v860
    %v862 = vpop.f32.mrf.mxu0
    %v863 = vadd.f32 %v718, %v862
    %864 = vdwg.mxu0
    %v865 = vxor.u32 %v790, 2147483648
    %v866 = vxor.u32 %v792, 2147483648
    %v867 = vxor.u32 %v861, 2147483648
    %v868 = vxor.u32 %v863, 2147483648
    %v869 = vmul.f32 %v865, 1.442695
    %v870 = vpow.pop %v869
    %v871 = vmul.f32 %v866, 1.442695
    %v872 = vpow.pop %v871
    %v873 = vmul.f32 %v867, 1.442695
    %v874 = vpow.pop %v873
    %v875 = vmul.f32 %v868, 1.442695
    %v876 = vpow.pop %v875
    %v877 = vadd.f32 %v870, 1.0
    %v878 = vadd.f32 %v872, 1.0
    %v879 = vadd.f32 %v874, 1.0
    %v880 = vadd.f32 %v876, 1.0
    %v881 = vrcp.pop %v877
    %v882 = vmul.f32 1.0, %v881
    %v883 = vrcp.pop %v878
    %v884 = vmul.f32 1.0, %v883
    %v885 = vrcp.pop %v879
    %v886 = vmul.f32 1.0, %v885
    %v887 = vrcp.pop %v880
    %v888 = vmul.f32 1.0, %v887
    %v889 = vlaneseq
    %v890 = vshrl.u32 %v889, 7
    %v891 = vsub.s32 0, %v890
    %v892 = vrot.slane %v53, %v891
    %v893 = vlaneseq
    %v894 = vshrl.u32 %v893, 7
    %v895 = vsub.s32 4, %v894
    %v896 = vrot.slane %v53, %v895
    %v897 = vlaneseq
    %v898 = vshrl.u32 %v897, 7
    %v899 = vsub.s32 0, %v898
    %v900 = vrot.slane %v54, %v899
    %v901 = vlaneseq
    %v902 = vshrl.u32 %v901, 7
    %v903 = vsub.s32 4, %v902
    %v904 = vrot.slane %v54, %v903
    %v905 = vlaneseq
    %v906 = vshrl.u32 %v905, 7
    %v907 = vsub.s32 0, %v906
    %v908 = vrot.slane %v55, %v907
    %v909 = vlaneseq
    %v910 = vshrl.u32 %v909, 7
    %v911 = vsub.s32 4, %v910
    %v912 = vrot.slane %v55, %v911
    %v913 = vlaneseq
    %v914 = vshrl.u32 %v913, 7
    %v915 = vsub.s32 0, %v914
    %v916 = vrot.slane %v56, %v915
    %v917 = vlaneseq
    %v918 = vshrl.u32 %v917, 7
    %v919 = vsub.s32 4, %v918
    %v920 = vrot.slane %v56, %v919
    %v921 = vsel %vm343, %v908, %v892
    %v922 = vsel %vm343, %v912, %v896
    %v923 = vsel %vm343, %v916, %v900
    %v924 = vsel %vm343, %v920, %v904
    %v929 = vmul.f32 %v882, %v921
    %v930 = vmul.f32 %v884, %v922
    %v931 = vmul.f32 %v886, %v923
    %v932 = vmul.f32 %v888, %v924
    %s933 = scalar_lea.vmem [#allocation6], 512
    %v934 = vld [vmem:[%s933] sm:$0xff]
    %v935 = vld [vmem:[%s933 + $0x8] sm:$0xff]
    %v936 = vld [vmem:[%s933 + $0x10] sm:$0xff]
    %v937 = vld [vmem:[%s933 + $0x18] sm:$0xff]
    %v938 = vld [vmem:[%s933 + $0x20] sm:$0xff]
    %v939 = vld [vmem:[%s933 + $0x28] sm:$0xff]
    %v940 = vld [vmem:[%s933 + $0x30] sm:$0xff]
    %v941 = vld [vmem:[%s933 + $0x38] sm:$0xff]
    %v942 = vld [vmem:[%s933 + $0x40] sm:$0xff]
    %v943 = vld [vmem:[%s933 + $0x48] sm:$0xff]
    %v944 = vld [vmem:[%s933 + $0x50] sm:$0xff]
    %v945 = vld [vmem:[%s933 + $0x58] sm:$0xff]
    %v946 = vld [vmem:[%s933 + $0x60] sm:$0xff]
    %v947 = vld [vmem:[%s933 + $0x68] sm:$0xff]
    %v948 = vld [vmem:[%s933 + $0x70] sm:$0xff]
    %v949 = vld [vmem:[%s933 + $0x78] sm:$0xff]
    %v950 = vld [vmem:[%s933 + $0x80] sm:$0xff]
    %v951 = vld [vmem:[%s933 + $0x88] sm:$0xff]
    %v952 = vld [vmem:[%s933 + $0x90] sm:$0xff]
    %v953 = vld [vmem:[%s933 + $0x98] sm:$0xff]
    %v954 = vld [vmem:[%s933 + $0xa0] sm:$0xff]
    %v955 = vld [vmem:[%s933 + $0xa8] sm:$0xff]
    %v956 = vld [vmem:[%s933 + $0xb0] sm:$0xff]
    %v957 = vld [vmem:[%s933 + $0xb8] sm:$0xff]
    %v958 = vld [vmem:[%s933 + $0xc0] sm:$0xff]
    %v959 = vld [vmem:[%s933 + $0xc8] sm:$0xff]
    %v960 = vld [vmem:[%s933 + $0xd0] sm:$0xff]
    %v961 = vld [vmem:[%s933 + $0xd8] sm:$0xff]
    %v962 = vld [vmem:[%s933 + $0xe0] sm:$0xff]
    %v963 = vld [vmem:[%s933 + $0xe8] sm:$0xff]
    %v964 = vld [vmem:[%s933 + $0xf0] sm:$0xff]
    %v965 = vld [vmem:[%s933 + $0xf8] sm:$0xff]
    %v966 = vld [vmem:[%s933 + $0x100] sm:$0xff]
    %v967 = vld [vmem:[%s933 + $0x108] sm:$0xff]
    %v968 = vld [vmem:[%s933 + $0x110] sm:$0xff]
    %v969 = vld [vmem:[%s933 + $0x118] sm:$0xff]
    %v970 = vld [vmem:[%s933 + $0x120] sm:$0xff]
    %v971 = vld [vmem:[%s933 + $0x128] sm:$0xff]
    %v972 = vld [vmem:[%s933 + $0x130] sm:$0xff]
    %v973 = vld [vmem:[%s933 + $0x138] sm:$0xff]
    %v974 = vld [vmem:[%s933 + $0x140] sm:$0xff]
    %v975 = vld [vmem:[%s933 + $0x148] sm:$0xff]
    %v976 = vld [vmem:[%s933 + $0x150] sm:$0xff]
    %v977 = vld [vmem:[%s933 + $0x158] sm:$0xff]
    %v978 = vld [vmem:[%s933 + $0x160] sm:$0xff]
    %v979 = vld [vmem:[%s933 + $0x168] sm:$0xff]
    %v980 = vld [vmem:[%s933 + $0x170] sm:$0xff]
    %v981 = vld [vmem:[%s933 + $0x178] sm:$0xff]
    %v982 = vld [vmem:[%s933 + $0x180] sm:$0xff]
    %v983 = vld [vmem:[%s933 + $0x188] sm:$0xff]
    %v984 = vld [vmem:[%s933 + $0x190] sm:$0xff]
    %v985 = vld [vmem:[%s933 + $0x198] sm:$0xff]
    %v986 = vld [vmem:[%s933 + $0x1a0] sm:$0xff]
    %v987 = vld [vmem:[%s933 + $0x1a8] sm:$0xff]
    %v988 = vld [vmem:[%s933 + $0x1b0] sm:$0xff]
    %v989 = vld [vmem:[%s933 + $0x1b8] sm:$0xff]
    %v990 = vld [vmem:[%s933 + $0x1c0] sm:$0xff]
    %v991 = vld [vmem:[%s933 + $0x1c8] sm:$0xff]
    %v992 = vld [vmem:[%s933 + $0x1d0] sm:$0xff]
    %v993 = vld [vmem:[%s933 + $0x1d8] sm:$0xff]
    %v994 = vld [vmem:[%s933 + $0x1e0] sm:$0xff]
    %v995 = vld [vmem:[%s933 + $0x1e8] sm:$0xff]
    %v996 = vld [vmem:[%s933 + $0x1f0] sm:$0xff]
    %v997 = vld [vmem:[%s933 + $0x1f8] sm:$0xff]
    %s998 = scalar_lea.vmem %s4, 4
    %v999 = vld [vmem:[%s998] sm:$0xf]
    %v1001 = vlaneseq
    %v1002 = vshrl.u32 %v1001, 7
    %v1003 = vsub.s32 0, %v1002
    %v1004 = vrot.slane %v999, %v1003
    %v1005 = vlaneseq
    %v1006 = vshrl.u32 %v1005, 7
    %v1007 = vsub.s32 1, %v1006
    %v1008 = vrot.slane %v999, %v1007
    %v1009 = vlaneseq
    %v1010 = vshrl.u32 %v1009, 7
    %v1011 = vsub.s32 2, %v1010
    %v1012 = vrot.slane %v999, %v1011
    %v1013 = vlaneseq
    %v1014 = vshrl.u32 %v1013, 7
    %v1015 = vsub.s32 3, %v1014
    %v1016 = vrot.slane %v999, %v1015
    %1021 = vmatprep.subr.mxu0 %v995
    %1022 = vmatpush1.msra.mxu0 %v994
    %1023 = vmatprep.subr.mxu0 %v991
    %1024 = vmatpush1.msra.mxu0 %v990
    %1025 = vmatprep.subr.mxu0 %v987
    %1026 = vmatpush1.msra.mxu0 %v986
    %1027 = vmatprep.subr.mxu0 %v983
    %1028 = vmatpush1.msra.mxu0 %v982
    %1029 = vmatprep.subr.mxu0 %v979
    %1030 = vmatpush1.msra.mxu0 %v978
    %1031 = vmatprep.subr.mxu0 %v975
    %1032 = vmatpush1.msra.mxu0 %v974
    %1033 = vmatprep.subr.mxu0 %v971
    %1034 = vmatpush1.msra.mxu0 %v970
    %1035 = vmatprep.subr.mxu0 %v967
    %1036 = vmatpush1.msra.mxu0 %v966
    %1037 = vmatprep.subr.mxu0 %v963
    %1038 = vmatpush1.msra.mxu0 %v962
    %1039 = vmatprep.subr.mxu0 %v959
    %1040 = vmatpush1.msra.mxu0 %v958
    %1041 = vmatprep.subr.mxu0 %v955
    %1042 = vmatpush1.msra.mxu0 %v954
    %1043 = vmatprep.subr.mxu0 %v951
    %1044 = vmatpush1.msra.mxu0 %v950
    %1045 = vmatprep.subr.mxu0 %v947
    %1046 = vmatpush1.msra.mxu0 %v946
    %1047 = vmatprep.subr.mxu0 %v943
    %1048 = vmatpush1.msra.mxu0 %v942
    %1049 = vmatprep.subr.mxu0 %v939
    %1050 = vmatpush1.msra.mxu0 %v938
    %1051 = vmatprep.subr.mxu0 %v935
    %1052 = vmatpush1.msra.mxu0 %v934
    %1053 = vmatprep.subr.mxu0 0.0
    %1054 = vmatpush2.msra.mxu0 0.0
    %1055 = vmatprep.subr.mxu0 0.0
    %1056 = vmatpush2.msra.mxu0 0.0
    %1057 = vmatprep.subr.mxu0 0.0
    %1058 = vmatpush2.msra.mxu0 0.0
    %1059 = vmatprep.subr.mxu0 0.0
    %1060 = vmatpush2.msra.mxu0 0.0
    %1061 = vmatprep.subr.mxu0 0.0
    %1062 = vmatpush2.msra.mxu0 0.0
    %1063 = vmatprep.subr.mxu0 0.0
    %1064 = vmatpush2.msra.mxu0 0.0
    %1065 = vmatprep.subr.mxu0 0.0
    %1066 = vmatpush2.msra.mxu0 0.0
    %1067 = vmatprep.subr.mxu0 0.0
    %1068 = vmatpush2.msra.mxu0 0.0
    %1069 = vmatprep.subr.mxu0 0.0
    %1070 = vmatpush2.msra.mxu0 0.0
    %1071 = vmatprep.subr.mxu0 0.0
    %1072 = vmatpush2.msra.mxu0 0.0
    %1073 = vmatprep.subr.mxu0 0.0
    %1074 = vmatpush2.msra.mxu0 0.0
    %1075 = vmatprep.subr.mxu0 0.0
    %1076 = vmatpush2.msra.mxu0 0.0
    %1077 = vmatprep.subr.mxu0 0.0
    %1078 = vmatpush2.msra.mxu0 0.0
    %1079 = vmatprep.subr.mxu0 0.0
    %1080 = vmatpush2.msra.mxu0 0.0
    %1081 = vmatprep.subr.mxu0 0.0
    %1082 = vmatpush2.msra.mxu0 0.0
    %1083 = vmatprep.subr.mxu0 0.0
    %1084 = vmatpush2.msra.mxu0 0.0
    %1085 = vmatprep.mubr.f32.mxu0 0.0
    %1086 = vmatmul.mubr.f32.gmra.mxu0 %v635
    %v1087 = vpop.f32.mrf.mxu0
    %v1088 = vadd.f32 %v1004, %v1087
    %v1089 = vpop.f32.mrf.mxu0
    %v1090 = vadd.f32 %v1008, %v1089
    %1091 = vdwg.mxu0
    %1092 = vmatprep.subr.mxu0 %v997
    %1093 = vmatpush1.msra.mxu0 %v996
    %1094 = vmatprep.subr.mxu0 %v993
    %1095 = vmatpush1.msra.mxu0 %v992
    %1096 = vmatprep.subr.mxu0 %v989
    %1097 = vmatpush1.msra.mxu0 %v988
    %1098 = vmatprep.subr.mxu0 %v985
    %1099 = vmatpush1.msra.mxu0 %v984
    %1100 = vmatprep.subr.mxu0 %v981
    %1101 = vmatpush1.msra.mxu0 %v980
    %1102 = vmatprep.subr.mxu0 %v977
    %1103 = vmatpush1.msra.mxu0 %v976
    %1104 = vmatprep.subr.mxu0 %v973
    %1105 = vmatpush1.msra.mxu0 %v972
    %1106 = vmatprep.subr.mxu0 %v969
    %1107 = vmatpush1.msra.mxu0 %v968
    %1108 = vmatprep.subr.mxu0 %v965
    %1109 = vmatpush1.msra.mxu0 %v964
    %1110 = vmatprep.subr.mxu0 %v961
    %1111 = vmatpush1.msra.mxu0 %v960
    %1112 = vmatprep.subr.mxu0 %v957
    %1113 = vmatpush1.msra.mxu0 %v956
    %1114 = vmatprep.subr.mxu0 %v953
    %1115 = vmatpush1.msra.mxu0 %v952
    %1116 = vmatprep.subr.mxu0 %v949
    %1117 = vmatpush1.msra.mxu0 %v948
    %1118 = vmatprep.subr.mxu0 %v945
    %1119 = vmatpush1.msra.mxu0 %v944
    %1120 = vmatprep.subr.mxu0 %v941
    %1121 = vmatpush1.msra.mxu0 %v940
    %1122 = vmatprep.subr.mxu0 %v937
    %1123 = vmatpush1.msra.mxu0 %v936
    %1124 = vmatprep.subr.mxu0 0.0
    %1125 = vmatpush2.msra.mxu0 0.0
    %1126 = vmatprep.subr.mxu0 0.0
    %1127 = vmatpush2.msra.mxu0 0.0
    %1128 = vmatprep.subr.mxu0 0.0
    %1129 = vmatpush2.msra.mxu0 0.0
    %1130 = vmatprep.subr.mxu0 0.0
    %1131 = vmatpush2.msra.mxu0 0.0
    %1132 = vmatprep.subr.mxu0 0.0
    %1133 = vmatpush2.msra.mxu0 0.0
    %1134 = vmatprep.subr.mxu0 0.0
    %1135 = vmatpush2.msra.mxu0 0.0
    %1136 = vmatprep.subr.mxu0 0.0
    %1137 = vmatpush2.msra.mxu0 0.0
    %1138 = vmatprep.subr.mxu0 0.0
    %1139 = vmatpush2.msra.mxu0 0.0
    %1140 = vmatprep.subr.mxu0 0.0
    %1141 = vmatpush2.msra.mxu0 0.0
    %1142 = vmatprep.subr.mxu0 0.0
    %1143 = vmatpush2.msra.mxu0 0.0
    %1144 = vmatprep.subr.mxu0 0.0
    %1145 = vmatpush2.msra.mxu0 0.0
    %1146 = vmatprep.subr.mxu0 0.0
    %1147 = vmatpush2.msra.mxu0 0.0
    %1148 = vmatprep.subr.mxu0 0.0
    %1149 = vmatpush2.msra.mxu0 0.0
    %1150 = vmatprep.subr.mxu0 0.0
    %1151 = vmatpush2.msra.mxu0 0.0
    %1152 = vmatprep.subr.mxu0 0.0
    %1153 = vmatpush2.msra.mxu0 0.0
    %1154 = vmatprep.subr.mxu0 0.0
    %1155 = vmatpush2.msra.mxu0 0.0
    %1156 = vmatprep.mubr.f32.mxu0 0.0
    %1157 = vmatmul.mubr.f32.gmra.mxu0 %v635
    %v1158 = vpop.f32.mrf.mxu0
    %v1159 = vadd.f32 %v1012, %v1158
    %v1160 = vpop.f32.mrf.mxu0
    %v1161 = vadd.f32 %v1016, %v1160
    %1162 = vdwg.mxu0
    %v1163 = vxor.u32 %v1088, 2147483648
    %v1164 = vxor.u32 %v1090, 2147483648
    %v1165 = vxor.u32 %v1159, 2147483648
    %v1166 = vxor.u32 %v1161, 2147483648
    %v1167 = vmul.f32 %v1163, 1.442695
    %v1168 = vpow.pop %v1167
    %v1169 = vmul.f32 %v1164, 1.442695
    %v1170 = vpow.pop %v1169
    %v1171 = vmul.f32 %v1165, 1.442695
    %v1172 = vpow.pop %v1171
    %v1173 = vmul.f32 %v1166, 1.442695
    %v1174 = vpow.pop %v1173
    %v1175 = vadd.f32 %v1168, 1.0
    %v1176 = vadd.f32 %v1170, 1.0
    %v1177 = vadd.f32 %v1172, 1.0
    %v1178 = vadd.f32 %v1174, 1.0
    %v1179 = vrcp.pop %v1175
    %v1180 = vmul.f32 1.0, %v1179
    %v1181 = vrcp.pop %v1176
    %v1182 = vmul.f32 1.0, %v1181
    %v1183 = vrcp.pop %v1177
    %v1184 = vmul.f32 1.0, %v1183
    %v1185 = vrcp.pop %v1178
    %v1186 = vmul.f32 1.0, %v1185
    %v1187 = vlaneseq
    %v1188 = vshrl.u32 %v1187, 7
    %v1189 = vsub.s32 1, %v1188
    %v1190 = vrot.slane %v53, %v1189
    %v1191 = vlaneseq
    %v1192 = vshrl.u32 %v1191, 7
    %v1193 = vsub.s32 5, %v1192
    %v1194 = vrot.slane %v53, %v1193
    %v1195 = vlaneseq
    %v1196 = vshrl.u32 %v1195, 7
    %v1197 = vsub.s32 1, %v1196
    %v1198 = vrot.slane %v54, %v1197
    %v1199 = vlaneseq
    %v1200 = vshrl.u32 %v1199, 7
    %v1201 = vsub.s32 5, %v1200
    %v1202 = vrot.slane %v54, %v1201
    %v1203 = vlaneseq
    %v1204 = vshrl.u32 %v1203, 7
    %v1205 = vsub.s32 1, %v1204
    %v1206 = vrot.slane %v55, %v1205
    %v1207 = vlaneseq
    %v1208 = vshrl.u32 %v1207, 7
    %v1209 = vsub.s32 5, %v1208
    %v1210 = vrot.slane %v55, %v1209
    %v1211 = vlaneseq
    %v1212 = vshrl.u32 %v1211, 7
    %v1213 = vsub.s32 1, %v1212
    %v1214 = vrot.slane %v56, %v1213
    %v1215 = vlaneseq
    %v1216 = vshrl.u32 %v1215, 7
    %v1217 = vsub.s32 5, %v1216
    %v1218 = vrot.slane %v56, %v1217
    %v1219 = vsel %vm343, %v1206, %v1190
    %v1220 = vsel %vm343, %v1210, %v1194
    %v1221 = vsel %vm343, %v1214, %v1198
    %v1222 = vsel %vm343, %v1218, %v1202
    %v1227 = vmul.f32 %v1180, %v1219
    %v1228 = vmul.f32 %v1182, %v1220
    %v1229 = vmul.f32 %v1184, %v1221
    %v1230 = vmul.f32 %v1186, %v1222
    %v1231 = vadd.f32 %v929, %v1227
    %v1232 = vadd.f32 %v930, %v1228
    %v1233 = vadd.f32 %v931, %v1229
    %v1234 = vadd.f32 %v932, %v1230
    %s1235 = scalar_lea.vmem [#allocation6], 1024
    %v1236 = vld [vmem:[%s1235] sm:$0xff]
    %v1237 = vld [vmem:[%s1235 + $0x8] sm:$0xff]
    %v1238 = vld [vmem:[%s1235 + $0x10] sm:$0xff]
    %v1239 = vld [vmem:[%s1235 + $0x18] sm:$0xff]
    %v1240 = vld [vmem:[%s1235 + $0x20] sm:$0xff]
    %v1241 = vld [vmem:[%s1235 + $0x28] sm:$0xff]
    %v1242 = vld [vmem:[%s1235 + $0x30] sm:$0xff]
    %v1243 = vld [vmem:[%s1235 + $0x38] sm:$0xff]
    %v1244 = vld [vmem:[%s1235 + $0x40] sm:$0xff]
    %v1245 = vld [vmem:[%s1235 + $0x48] sm:$0xff]
    %v1246 = vld [vmem:[%s1235 + $0x50] sm:$0xff]
    %v1247 = vld [vmem:[%s1235 + $0x58] sm:$0xff]
    %v1248 = vld [vmem:[%s1235 + $0x60] sm:$0xff]
    %v1249 = vld [vmem:[%s1235 + $0x68] sm:$0xff]
    %v1250 = vld [vmem:[%s1235 + $0x70] sm:$0xff]
    %v1251 = vld [vmem:[%s1235 + $0x78] sm:$0xff]
    %v1252 = vld [vmem:[%s1235 + $0x80] sm:$0xff]
    %v1253 = vld [vmem:[%s1235 + $0x88] sm:$0xff]
    %v1254 = vld [vmem:[%s1235 + $0x90] sm:$0xff]
    %v1255 = vld [vmem:[%s1235 + $0x98] sm:$0xff]
    %v1256 = vld [vmem:[%s1235 + $0xa0] sm:$0xff]
    %v1257 = vld [vmem:[%s1235 + $0xa8] sm:$0xff]
    %v1258 = vld [vmem:[%s1235 + $0xb0] sm:$0xff]
    %v1259 = vld [vmem:[%s1235 + $0xb8] sm:$0xff]
    %v1260 = vld [vmem:[%s1235 + $0xc0] sm:$0xff]
    %v1261 = vld [vmem:[%s1235 + $0xc8] sm:$0xff]
    %v1262 = vld [vmem:[%s1235 + $0xd0] sm:$0xff]
    %v1263 = vld [vmem:[%s1235 + $0xd8] sm:$0xff]
    %v1264 = vld [vmem:[%s1235 + $0xe0] sm:$0xff]
    %v1265 = vld [vmem:[%s1235 + $0xe8] sm:$0xff]
    %v1266 = vld [vmem:[%s1235 + $0xf0] sm:$0xff]
    %v1267 = vld [vmem:[%s1235 + $0xf8] sm:$0xff]
    %v1268 = vld [vmem:[%s1235 + $0x100] sm:$0xff]
    %v1269 = vld [vmem:[%s1235 + $0x108] sm:$0xff]
    %v1270 = vld [vmem:[%s1235 + $0x110] sm:$0xff]
    %v1271 = vld [vmem:[%s1235 + $0x118] sm:$0xff]
    %v1272 = vld [vmem:[%s1235 + $0x120] sm:$0xff]
    %v1273 = vld [vmem:[%s1235 + $0x128] sm:$0xff]
    %v1274 = vld [vmem:[%s1235 + $0x130] sm:$0xff]
    %v1275 = vld [vmem:[%s1235 + $0x138] sm:$0xff]
    %v1276 = vld [vmem:[%s1235 + $0x140] sm:$0xff]
    %v1277 = vld [vmem:[%s1235 + $0x148] sm:$0xff]
    %v1278 = vld [vmem:[%s1235 + $0x150] sm:$0xff]
    %v1279 = vld [vmem:[%s1235 + $0x158] sm:$0xff]
    %v1280 = vld [vmem:[%s1235 + $0x160] sm:$0xff]
    %v1281 = vld [vmem:[%s1235 + $0x168] sm:$0xff]
    %v1282 = vld [vmem:[%s1235 + $0x170] sm:$0xff]
    %v1283 = vld [vmem:[%s1235 + $0x178] sm:$0xff]
    %v1284 = vld [vmem:[%s1235 + $0x180] sm:$0xff]
    %v1285 = vld [vmem:[%s1235 + $0x188] sm:$0xff]
    %v1286 = vld [vmem:[%s1235 + $0x190] sm:$0xff]
    %v1287 = vld [vmem:[%s1235 + $0x198] sm:$0xff]
    %v1288 = vld [vmem:[%s1235 + $0x1a0] sm:$0xff]
    %v1289 = vld [vmem:[%s1235 + $0x1a8] sm:$0xff]
    %v1290 = vld [vmem:[%s1235 + $0x1b0] sm:$0xff]
    %v1291 = vld [vmem:[%s1235 + $0x1b8] sm:$0xff]
    %v1292 = vld [vmem:[%s1235 + $0x1c0] sm:$0xff]
    %v1293 = vld [vmem:[%s1235 + $0x1c8] sm:$0xff]
    %v1294 = vld [vmem:[%s1235 + $0x1d0] sm:$0xff]
    %v1295 = vld [vmem:[%s1235 + $0x1d8] sm:$0xff]
    %v1296 = vld [vmem:[%s1235 + $0x1e0] sm:$0xff]
    %v1297 = vld [vmem:[%s1235 + $0x1e8] sm:$0xff]
    %v1298 = vld [vmem:[%s1235 + $0x1f0] sm:$0xff]
    %v1299 = vld [vmem:[%s1235 + $0x1f8] sm:$0xff]
    %s1300 = scalar_lea.vmem %s4, 8
    %v1301 = vld [vmem:[%s1300] sm:$0xf]
    %v1303 = vlaneseq
    %v1304 = vshrl.u32 %v1303, 7
    %v1305 = vsub.s32 0, %v1304
    %v1306 = vrot.slane %v1301, %v1305
    %v1307 = vlaneseq
    %v1308 = vshrl.u32 %v1307, 7
    %v1309 = vsub.s32 1, %v1308
    %v1310 = vrot.slane %v1301, %v1309
    %v1311 = vlaneseq
    %v1312 = vshrl.u32 %v1311, 7
    %v1313 = vsub.s32 2, %v1312
    %v1314 = vrot.slane %v1301, %v1313
    %v1315 = vlaneseq
    %v1316 = vshrl.u32 %v1315, 7
    %v1317 = vsub.s32 3, %v1316
    %v1318 = vrot.slane %v1301, %v1317
    %1323 = vmatprep.subr.mxu0 %v1297
    %1324 = vmatpush1.msra.mxu0 %v1296
    %1325 = vmatprep.subr.mxu0 %v1293
    %1326 = vmatpush1.msra.mxu0 %v1292
    %1327 = vmatprep.subr.mxu0 %v1289
    %1328 = vmatpush1.msra.mxu0 %v1288
    %1329 = vmatprep.subr.mxu0 %v1285
    %1330 = vmatpush1.msra.mxu0 %v1284
    %1331 = vmatprep.subr.mxu0 %v1281
    %1332 = vmatpush1.msra.mxu0 %v1280
    %1333 = vmatprep.subr.mxu0 %v1277
    %1334 = vmatpush1.msra.mxu0 %v1276
    %1335 = vmatprep.subr.mxu0 %v1273
    %1336 = vmatpush1.msra.mxu0 %v1272
    %1337 = vmatprep.subr.mxu0 %v1269
    %1338 = vmatpush1.msra.mxu0 %v1268
    %1339 = vmatprep.subr.mxu0 %v1265
    %1340 = vmatpush1.msra.mxu0 %v1264
    %1341 = vmatprep.subr.mxu0 %v1261
    %1342 = vmatpush1.msra.mxu0 %v1260
    %1343 = vmatprep.subr.mxu0 %v1257
    %1344 = vmatpush1.msra.mxu0 %v1256
    %1345 = vmatprep.subr.mxu0 %v1253
    %1346 = vmatpush1.msra.mxu0 %v1252
    %1347 = vmatprep.subr.mxu0 %v1249
    %1348 = vmatpush1.msra.mxu0 %v1248
    %1349 = vmatprep.subr.mxu0 %v1245
    %1350 = vmatpush1.msra.mxu0 %v1244
    %1351 = vmatprep.subr.mxu0 %v1241
    %1352 = vmatpush1.msra.mxu0 %v1240
    %1353 = vmatprep.subr.mxu0 %v1237
    %1354 = vmatpush1.msra.mxu0 %v1236
    %1355 = vmatprep.subr.mxu0 0.0
    %1356 = vmatpush2.msra.mxu0 0.0
    %1357 = vmatprep.subr.mxu0 0.0
    %1358 = vmatpush2.msra.mxu0 0.0
    %1359 = vmatprep.subr.mxu0 0.0
    %1360 = vmatpush2.msra.mxu0 0.0
    %1361 = vmatprep.subr.mxu0 0.0
    %1362 = vmatpush2.msra.mxu0 0.0
    %1363 = vmatprep.subr.mxu0 0.0
    %1364 = vmatpush2.msra.mxu0 0.0
    %1365 = vmatprep.subr.mxu0 0.0
    %1366 = vmatpush2.msra.mxu0 0.0
    %1367 = vmatprep.subr.mxu0 0.0
    %1368 = vmatpush2.msra.mxu0 0.0
    %1369 = vmatprep.subr.mxu0 0.0
    %1370 = vmatpush2.msra.mxu0 0.0
    %1371 = vmatprep.subr.mxu0 0.0
    %1372 = vmatpush2.msra.mxu0 0.0
    %1373 = vmatprep.subr.mxu0 0.0
    %1374 = vmatpush2.msra.mxu0 0.0
    %1375 = vmatprep.subr.mxu0 0.0
    %1376 = vmatpush2.msra.mxu0 0.0
    %1377 = vmatprep.subr.mxu0 0.0
    %1378 = vmatpush2.msra.mxu0 0.0
    %1379 = vmatprep.subr.mxu0 0.0
    %1380 = vmatpush2.msra.mxu0 0.0
    %1381 = vmatprep.subr.mxu0 0.0
    %1382 = vmatpush2.msra.mxu0 0.0
    %1383 = vmatprep.subr.mxu0 0.0
    %1384 = vmatpush2.msra.mxu0 0.0
    %1385 = vmatprep.subr.mxu0 0.0
    %1386 = vmatpush2.msra.mxu0 0.0
    %1387 = vmatprep.mubr.f32.mxu0 0.0
    %1388 = vmatmul.mubr.f32.gmra.mxu0 %v636
    %v1389 = vpop.f32.mrf.mxu0
    %v1390 = vadd.f32 %v1306, %v1389
    %v1391 = vpop.f32.mrf.mxu0
    %v1392 = vadd.f32 %v1310, %v1391
    %1393 = vdwg.mxu0
    %1394 = vmatprep.subr.mxu0 %v1299
    %1395 = vmatpush1.msra.mxu0 %v1298
    %1396 = vmatprep.subr.mxu0 %v1295
    %1397 = vmatpush1.msra.mxu0 %v1294
    %1398 = vmatprep.subr.mxu0 %v1291
    %1399 = vmatpush1.msra.mxu0 %v1290
    %1400 = vmatprep.subr.mxu0 %v1287
    %1401 = vmatpush1.msra.mxu0 %v1286
    %1402 = vmatprep.subr.mxu0 %v1283
    %1403 = vmatpush1.msra.mxu0 %v1282
    %1404 = vmatprep.subr.mxu0 %v1279
    %1405 = vmatpush1.msra.mxu0 %v1278
    %1406 = vmatprep.subr.mxu0 %v1275
    %1407 = vmatpush1.msra.mxu0 %v1274
    %1408 = vmatprep.subr.mxu0 %v1271
    %1409 = vmatpush1.msra.mxu0 %v1270
    %1410 = vmatprep.subr.mxu0 %v1267
    %1411 = vmatpush1.msra.mxu0 %v1266
    %1412 = vmatprep.subr.mxu0 %v1263
    %1413 = vmatpush1.msra.mxu0 %v1262
    %1414 = vmatprep.subr.mxu0 %v1259
    %1415 = vmatpush1.msra.mxu0 %v1258
    %1416 = vmatprep.subr.mxu0 %v1255
    %1417 = vmatpush1.msra.mxu0 %v1254
    %1418 = vmatprep.subr.mxu0 %v1251
    %1419 = vmatpush1.msra.mxu0 %v1250
    %1420 = vmatprep.subr.mxu0 %v1247
    %1421 = vmatpush1.msra.mxu0 %v1246
    %1422 = vmatprep.subr.mxu0 %v1243
    %1423 = vmatpush1.msra.mxu0 %v1242
    %1424 = vmatprep.subr.mxu0 %v1239
    %1425 = vmatpush1.msra.mxu0 %v1238
    %1426 = vmatprep.subr.mxu0 0.0
    %1427 = vmatpush2.msra.mxu0 0.0
    %1428 = vmatprep.subr.mxu0 0.0
    %1429 = vmatpush2.msra.mxu0 0.0
    %1430 = vmatprep.subr.mxu0 0.0
    %1431 = vmatpush2.msra.mxu0 0.0
    %1432 = vmatprep.subr.mxu0 0.0
    %1433 = vmatpush2.msra.mxu0 0.0
    %1434 = vmatprep.subr.mxu0 0.0
    %1435 = vmatpush2.msra.mxu0 0.0
    %1436 = vmatprep.subr.mxu0 0.0
    %1437 = vmatpush2.msra.mxu0 0.0
    %1438 = vmatprep.subr.mxu0 0.0
    %1439 = vmatpush2.msra.mxu0 0.0
    %1440 = vmatprep.subr.mxu0 0.0
    %1441 = vmatpush2.msra.mxu0 0.0
    %1442 = vmatprep.subr.mxu0 0.0
    %1443 = vmatpush2.msra.mxu0 0.0
    %1444 = vmatprep.subr.mxu0 0.0
    %1445 = vmatpush2.msra.mxu0 0.0
    %1446 = vmatprep.subr.mxu0 0.0
    %1447 = vmatpush2.msra.mxu0 0.0
    %1448 = vmatprep.subr.mxu0 0.0
    %1449 = vmatpush2.msra.mxu0 0.0
    %1450 = vmatprep.subr.mxu0 0.0
    %1451 = vmatpush2.msra.mxu0 0.0
    %1452 = vmatprep.subr.mxu0 0.0
    %1453 = vmatpush2.msra.mxu0 0.0
    %1454 = vmatprep.subr.mxu0 0.0
    %1455 = vmatpush2.msra.mxu0 0.0
    %1456 = vmatprep.subr.mxu0 0.0
    %1457 = vmatpush2.msra.mxu0 0.0
    %1458 = vmatprep.mubr.f32.mxu0 0.0
    %1459 = vmatmul.mubr.f32.gmra.mxu0 %v636
    %v1460 = vpop.f32.mrf.mxu0
    %v1461 = vadd.f32 %v1314, %v1460
    %v1462 = vpop.f32.mrf.mxu0
    %v1463 = vadd.f32 %v1318, %v1462
    %1464 = vdwg.mxu0
    %v1465 = vxor.u32 %v1390, 2147483648
    %v1466 = vxor.u32 %v1392, 2147483648
    %v1467 = vxor.u32 %v1461, 2147483648
    %v1468 = vxor.u32 %v1463, 2147483648
    %v1469 = vmul.f32 %v1465, 1.442695
    %v1470 = vpow.pop %v1469
    %v1471 = vmul.f32 %v1466, 1.442695
    %v1472 = vpow.pop %v1471
    %v1473 = vmul.f32 %v1467, 1.442695
    %v1474 = vpow.pop %v1473
    %v1475 = vmul.f32 %v1468, 1.442695
    %v1476 = vpow.pop %v1475
    %v1477 = vadd.f32 %v1470, 1.0
    %v1478 = vadd.f32 %v1472, 1.0
    %v1479 = vadd.f32 %v1474, 1.0
    %v1480 = vadd.f32 %v1476, 1.0
    %v1481 = vrcp.pop %v1477
    %v1482 = vmul.f32 1.0, %v1481
    %v1483 = vrcp.pop %v1478
    %v1484 = vmul.f32 1.0, %v1483
    %v1485 = vrcp.pop %v1479
    %v1486 = vmul.f32 1.0, %v1485
    %v1487 = vrcp.pop %v1480
    %v1488 = vmul.f32 1.0, %v1487
    %v1489 = vlaneseq
    %v1490 = vshrl.u32 %v1489, 7
    %v1491 = vsub.s32 2, %v1490
    %v1492 = vrot.slane %v53, %v1491
    %v1493 = vlaneseq
    %v1494 = vshrl.u32 %v1493, 7
    %v1495 = vsub.s32 6, %v1494
    %v1496 = vrot.slane %v53, %v1495
    %v1497 = vlaneseq
    %v1498 = vshrl.u32 %v1497, 7
    %v1499 = vsub.s32 2, %v1498
    %v1500 = vrot.slane %v54, %v1499
    %v1501 = vlaneseq
    %v1502 = vshrl.u32 %v1501, 7
    %v1503 = vsub.s32 6, %v1502
    %v1504 = vrot.slane %v54, %v1503
    %v1505 = vlaneseq
    %v1506 = vshrl.u32 %v1505, 7
    %v1507 = vsub.s32 2, %v1506
    %v1508 = vrot.slane %v55, %v1507
    %v1509 = vlaneseq
    %v1510 = vshrl.u32 %v1509, 7
    %v1511 = vsub.s32 6, %v1510
    %v1512 = vrot.slane %v55, %v1511
    %v1513 = vlaneseq
    %v1514 = vshrl.u32 %v1513, 7
    %v1515 = vsub.s32 2, %v1514
    %v1516 = vrot.slane %v56, %v1515
    %v1517 = vlaneseq
    %v1518 = vshrl.u32 %v1517, 7
    %v1519 = vsub.s32 6, %v1518
    %v1520 = vrot.slane %v56, %v1519
    %v1521 = vsel %vm343, %v1508, %v1492
    %v1522 = vsel %vm343, %v1512, %v1496
    %v1523 = vsel %vm343, %v1516, %v1500
    %v1524 = vsel %vm343, %v1520, %v1504
    %v1529 = vmul.f32 %v1482, %v1521
    %v1530 = vmul.f32 %v1484, %v1522
    %v1531 = vmul.f32 %v1486, %v1523
    %v1532 = vmul.f32 %v1488, %v1524
    %v1533 = vadd.f32 %v1231, %v1529
    %v1534 = vadd.f32 %v1232, %v1530
    %v1535 = vadd.f32 %v1233, %v1531
    %v1536 = vadd.f32 %v1234, %v1532
    %s1537 = sld [smem:[#allocation2]]
    %s1538 = smul.f32 %s1537, 3.0
    %v1539 = vstv %s1538
    %v1540 = vmul.f32 %v1533, %v1539
    %v1541 = vmul.f32 %v1534, %v1539
    %v1542 = vmul.f32 %v1535, %v1539
    %v1543 = vmul.f32 %v1536, %v1539
    %v1548 = vcombine.low %v1540, %v1541
    %v1549 = vcombine.low %v1542, %v1543
    %v1551 = vunpack.c.l.s4 1983009808
    %v1552 = vunpack.c.0.s8 %v1551
    %v1553 = vlaneseq
    %v1554 = vshrl.u32 %v1553, 7
    %v1555 = vsub.s32 %v1552, %v1554
    %v1556 = vrot.slane %v1548, %v1555
    %v1558 = vunpack.c.l.s4 1983009808
    %v1559 = vunpack.c.0.s8 %v1558
    %v1560 = vlaneseq
    %v1561 = vshrl.u32 %v1560, 7
    %v1562 = vsub.s32 %v1559, %v1561
    %v1563 = vrot.slane %v1549, %v1562
    %v1564 = vcombine.low %v1556, %v1563
    %1566 = vst [vmem:[#allocation8] sm:$0xff] %v1564
    // Predicated region
    $region34: #{tpu_custom_call.1} parent=1 // pred_check
      _
    $region35: #{tpu_custom_call.1} parent=1 // pred_check_branch
      %1568 = sbr.rel (0) target = $region37
    $region36: #{tpu_custom_call.1} parent=1 // pred_region
      %s1570 = ssub.s32 128, 128
      %1571 = vsyncadd [#allocation5], %s1570
      %s1573 = sshll.u32 [#allocation8], 4
      %s1574 = int_to_ptr.vmem [resolvable:$true] %s1573
      %1576 = dma.vmem_to_hbm [thread:$0]  %s1574, 128, %s6, [#allocation5]
    $region37: #{tpu_custom_call.1} parent=1 // pred_fallthru
      _
    // Predicated region
    $region38: #{tpu_custom_call.1} parent=1 // pred_check
      _
    $region39: #{tpu_custom_call.1} parent=1 // pred_check_branch
      %1578 = sbr.rel (0) target = $region41
    $region40: #{tpu_custom_call.1} parent=1 // pred_region
      %1579 = dma.done [#allocation5], 128
    $region41: #{tpu_custom_call.1} parent=1 // pred_fallthru
      _
    %1580 = vsyncpa [#allocation4], 1
    %1581 = vsyncpa [#allocation7], 1
    %1582 = vsyncpa [#allocation5], 1

</llo_original>
